<compile_context>
chip_gen: v6e
topology: v6e:2x2x1
jax: 0.10.0
libtpu: 0.0.40
codegen_flags: <defaults>
</compile_context>

<pallas_src>
import functools

import jax
import jax.numpy as jnp
from jax.experimental import pallas as pl
from jax.experimental.pallas import tpu as pltpu


# ------------------------------ kernel --------------------------------------


def _final_layer_kernel(x_ref, shift_ref, scale_ref, w_ref, b_ref, o_ref, *, eps):
    """out = (LayerNorm(x) * (1 + scale) + shift) @ W_lin + b_lin  (fused)."""
    # Single f32 upcast of the tile; all LN statistics in f32.
    x = x_ref[...].astype(jnp.float32)                        # (tile_T, C)
    u = jnp.mean(x, axis=-1, keepdims=True)
    d = x - u
    var = jnp.mean(d * d, axis=-1, keepdims=True)
    xn = d * jax.lax.rsqrt(var + eps)

    # adaLN modulation (broadcast over rows); shift/scale are lane-aligned (1, C).
    y = xn * (1.0 + scale_ref[...].astype(jnp.float32)) + shift_ref[...].astype(jnp.float32)

    # Single cast to bf16 right before the MXU; W_lin is already bf16 (pre-cast in
    # the wrapper, so no per-grid-step VPU cast of the weight tile).
    y16 = y.astype(jnp.bfloat16)
    out = jnp.dot(y16, w_ref[...], preferred_element_type=jnp.float32)
    o_ref[...] = (out + b_ref[...].astype(jnp.float32)).astype(o_ref.dtype)


# ------------------------------ tiling helpers -------------------------------


def _sanitize_tile(t, T):
    """Clamp to [8, T] and round to a multiple of 8 sublanes (ragged edge is OK)."""
    if T < 8:
        return T                       # full-extent block is the only legal option
    t = max(8, min(int(t), T))
    return (t // 8) * 8


def _pick_tile_tokens(T, C, out_Cp, x_bytes, budget_bytes):
    """Target row tile: large (amortize per-step overhead, fill MXU M dim), bounded
    by a VMEM budget that also counts the in-kernel f32 intermediates."""
    per_row = (2 * C * x_bytes            # x tile, double-buffered
               + 2 * out_Cp * x_bytes     # out tile, double-buffered
               + 4 * C * 4                # f32 LN temporaries (x, d, xn, y)
               + out_Cp * 4               # f32 matmul accumulator
               + C * 2)                   # bf16 y fed to the MXU
    t = budget_bytes // max(per_row, 1)
    t = max(8, min(int(t), 1024))
    if t >= 256:
        t = (t // 256) * 256              # MXU row granularity on v6e/v7x
    return t


# ------------------------------ wrapper --------------------------------------


def final_layer(x, c, w_ada, b_ada, w_lin, b_lin, *, eps=1e-6, tile_tokens=None):
    """JAX/Pallas equivalent of FinalLayer.forward(x, c).

    x      : [B, T, C]            tokens
    c      : [B, 1, C] or [B, C]  conditioning
    w_ada  : [C, 2C], b_ada: [2C]   adaLN_modulation linear (input-major layout)
    w_lin  : [C, OUT], b_lin: [OUT] final linear (input-major layout)
    """
    B, T, C = x.shape
    out_C = w_lin.shape[1]

    # ---- adaLN modulation in plain jnp (tiny: (B,C) x (C,2C)), no extra kernel ----
    cf = c.reshape(B, C).astype(jnp.float32)
    silu = cf * jax.nn.sigmoid(cf)
    mod = silu @ w_ada.astype(jnp.float32) + b_ada.astype(jnp.float32)   # (B, 2C)
    shift, scale = jnp.split(mod, 2, axis=-1)
    shift = shift.reshape(B, 1, C)                 # lane-aligned blocks, no in-kernel
    scale = scale.reshape(B, 1, C)                 # mid-tile slicing of mod

    # ---- lane-dense output: pad OUT up to a multiple of 128, slice afterwards ----
    out_Cp = ((out_C + 127) // 128) * 128
    w = w_lin.astype(jnp.bfloat16)                 # pre-cast resident weight to bf16
    b = b_lin.astype(jnp.float32).reshape(1, out_C)
    if out_Cp != out_C:
        w = jnp.pad(w, ((0, 0), (0, out_Cp - out_C)))
        b = jnp.pad(b, ((0, 0), (0, out_Cp - out_C)))

    # ---- generation-aware VMEM budgets -------------------------------------------
    try:
        info = pltpu.get_tpu_info()
        vmem_cap = int(getattr(info, "vmem_capacity_bytes", 64 << 20))
    except Exception:
        vmem_cap = 64 << 20                        # conservative (v7x-class)
    if vmem_cap <= (96 << 20):                     # v7x: 64 MiB VMEM per TensorCore
        tile_budget = 12 << 20
        vmem_cap_limit = 48 << 20                  # leave headroom for Mosaic scratch
    else:                                          # v5e / v6e: 128 MiB VMEM
        tile_budget = 32 << 20
        vmem_cap_limit = 96 << 20

    x_bytes = jnp.dtype(x.dtype).itemsize
    if tile_tokens is None:
        tile_tokens = _pick_tile_tokens(T, C, out_Cp, x_bytes, tile_budget)
    tile_tokens = _sanitize_tile(tile_tokens, T)

    # Keep at least 2 programs so both TensorCores on v7x get work.
    if B * pl.cdiv(T, tile_tokens) < 2 and T >= 16:
        tile_tokens = _sanitize_tile(-(-T // 2), T)
    n_tok_tiles = pl.cdiv(T, tile_tokens)

    # VMEM estimate including f32 intermediates + headroom for Mosaic internals.
    vmem_needed = (2 * tile_tokens * C * x_bytes
                   + 2 * tile_tokens * out_Cp * x_bytes
                   + 4 * tile_tokens * C * 4
                   + tile_tokens * out_Cp * 4
                   + tile_tokens * C * 2
                   + 2 * C * out_Cp * 2            # resident bf16 weight (<=2 bufs)
                   + 8 * (C + out_Cp) * 4          # shift / scale / bias blocks
                   + (2 << 20))
    vmem_limit = int(min(max(vmem_needed, 32 << 20), vmem_cap_limit))

    kernel = functools.partial(_final_layer_kernel, eps=eps)

    def _call(single_buffer_weights):
        w_kw = {}
        if single_buffer_weights:
            # Constant index_map -> no need to double-buffer the resident weight.
            w_kw = dict(pipeline_mode=pl.Buffered(1))
        in_specs = [
            pl.BlockSpec((None, tile_tokens, C), lambda bi, ti: (bi, ti, 0)),   # x
            pl.BlockSpec((None, 1, C), lambda bi, ti: (bi, 0, 0)),              # shift
            pl.BlockSpec((None, 1, C), lambda bi, ti: (bi, 0, 0)),              # scale
            pl.BlockSpec((C, out_Cp), lambda bi, ti: (0, 0), **w_kw),           # W_lin
            pl.BlockSpec((1, out_Cp), lambda bi, ti: (0, 0), **w_kw),           # b_lin
        ]
        out_specs = pl.BlockSpec((None, tile_tokens, out_Cp),
                                 lambda bi, ti: (bi, ti, 0))
        return pl.pallas_call(
            kernel,
            out_shape=jax.ShapeDtypeStruct((B, T, out_Cp), x.dtype),
            grid=(B, n_tok_tiles),
            in_specs=in_specs,
            out_specs=out_specs,
            compiler_params=pltpu.CompilerParams(
                dimension_semantics=("parallel", "parallel"),
                vmem_limit_bytes=vmem_limit),
        )(x, shift, scale, w, b)

    try:
        out = _call(True)
    except Exception:
        # Fallback if this JAX build rejects pipeline_mode=pl.Buffered(1).
        out = _call(False)

    if out_Cp != out_C:
        out = out[..., :out_C]
    return out


# ------------------------------ reference -----------------------------------


def final_layer_ref(x, c, w_ada, b_ada, w_lin, b_lin, eps=1e-6):
    """Pure-jnp reference matching the kernel's numerics (f32 LN, bf16 MXU matmul)."""
    cf = c.astype(jnp.float32)
    silu = cf * jax.nn.sigmoid(cf)
    mod = jnp.einsum("...c,cd->...d", silu, w_ada.astype(jnp.float32)) + b_ada
    shift, scale = jnp.split(mod, 2, axis=-1)
    xf = x.astype(jnp.float32)
    u = xf.mean(-1, keepdims=True)
    var = ((xf - u) ** 2).mean(-1, keepdims=True)
    xn = (xf - u) * jax.lax.rsqrt(var + eps)
    y = xn * (1.0 + scale) + shift
    out = jnp.einsum("...c,co->...o", y.astype(jnp.bfloat16),
                     w_lin.astype(jnp.bfloat16),
                     preferred_element_type=jnp.float32) + b_lin
    return out.astype(x.dtype)


# ------------------------------ main ----------------------------------------


if __name__ == "__main__":
    # model_channels=256, out_channels=128 -> lane-dense (multiples of 128).
    B, T, C, OUT = 2, 256, 256, 128
    eps = 1e-6

    key = jax.random.PRNGKey(0)
    k1, k2, k3, k4, k5, k6 = jax.random.split(key, 6)
    x = jax.random.normal(k1, (B, T, C), dtype=jnp.float32)
    c = jax.random.normal(k2, (B, 1, C), dtype=jnp.float32)

    # Linear weights in input-major layout (PyTorch does x @ W.T; here W := W_pt.T).
    w_ada = jax.random.normal(k3, (C, 2 * C), dtype=jnp.float32) * 0.02
    b_ada = jax.random.normal(k4, (2 * C,), dtype=jnp.float32) * 0.02
    w_lin = jax.random.normal(k5, (C, OUT), dtype=jnp.float32) * 0.02
    b_lin = jax.random.normal(k6, (OUT,), dtype=jnp.float32) * 0.02

    out = final_layer(x, c, w_ada, b_ada, w_lin, b_lin, eps=eps)
    jax.block_until_ready(out)

    ref = final_layer_ref(x, c, w_ada, b_ada, w_lin, b_lin, eps=eps)

    assert out.shape == (B, T, OUT) and out.dtype == x.dtype
    err = float(jnp.max(jnp.abs(out - ref)))
    # bf16 MXU operands: tolerance reflects bf16 rounding / accumulation order.
    assert err < 1e-2, err

    print("KERNEL_OK")
</pallas_src>

<mosaic_0001>
module attributes {stable_mosaic.version = 11 : i64} {
  func.func @_final_layer_kernel(%arg0: i32, %arg1: i32, %arg2: memref<1x256x256xf32, #tpu.memory_space<vmem>>, %arg3: memref<1x1x256xf32, #tpu.memory_space<vmem>>, %arg4: memref<1x1x256xf32, #tpu.memory_space<vmem>>, %arg5: memref<256x128xbf16, #tpu.memory_space<vmem>>, %arg6: memref<1x128xf32, #tpu.memory_space<vmem>>, %arg7: memref<1x256x128xf32, #tpu.memory_space<vmem>>) attributes {dimension_semantics = [#tpu.dimension_semantics<parallel>, #tpu.dimension_semantics<parallel>], iteration_bounds = array<i64: 2, 1>, scalar_prefetch = 0 : i64, scratch_operands = 0 : i64, tpu.core_type = #tpu.core_type<tc>, window_params = [{transform_indices = @transform_0, window_bounds = array<i64: 1, 256, 256>}, {transform_indices = @transform_1, window_bounds = array<i64: 1, 1, 256>}, {transform_indices = @transform_2, window_bounds = array<i64: 1, 1, 256>}, {pipeline_mode = #tpu.pipeline_mode<synchronous>, transform_indices = @transform_3, window_bounds = array<i64: 256, 128>}, {pipeline_mode = #tpu.pipeline_mode<synchronous>, transform_indices = @transform_4, window_bounds = array<i64: 1, 128>}, {transform_indices = @transform_5, window_bounds = array<i64: 1, 256, 128>}]} {
    %c0 = arith.constant 0 : index
    %c0_0 = arith.constant 0 : index
    %c0_1 = arith.constant 0 : index
    %0 = vector.load %arg2[%c0, %c0_0, %c0_1] : memref<1x256x256xf32, #tpu.memory_space<vmem>>, vector<1x256x256xf32>
    %1 = vector.shape_cast %0 : vector<1x256x256xf32> to vector<256x256xf32>
    %cst = arith.constant dense<0.000000e+00> : vector<256xf32>
    %2 = vector.multi_reduction <add>, %1, %cst [1] : vector<256x256xf32> to vector<256xf32>
    %3 = vector.shape_cast %2 : vector<256xf32> to vector<256x1xf32>
    %cst_2 = arith.constant 2.560000e+02 : f32
    %4 = vector.broadcast %cst_2 : f32 to vector<256x1xf32>
    %5 = arith.divf %3, %4 : vector<256x1xf32>
    %6 = vector.broadcast %5 : vector<256x1xf32> to vector<256x256xf32>
    %7 = arith.subf %1, %6 : vector<256x256xf32>
    %8 = arith.mulf %7, %7 : vector<256x256xf32>
    %cst_3 = arith.constant dense<0.000000e+00> : vector<256xf32>
    %9 = vector.multi_reduction <add>, %8, %cst_3 [1] : vector<256x256xf32> to vector<256xf32>
    %10 = vector.shape_cast %9 : vector<256xf32> to vector<256x1xf32>
    %cst_4 = arith.constant 2.560000e+02 : f32
    %11 = vector.broadcast %cst_4 : f32 to vector<256x1xf32>
    %12 = arith.divf %10, %11 : vector<256x1xf32>
    %cst_5 = arith.constant 9.99999997E-7 : f32
    %13 = vector.broadcast %cst_5 : f32 to vector<256x1xf32>
    %14 = arith.addf %12, %13 : vector<256x1xf32>
    %15 = math.rsqrt %14 : vector<256x1xf32>
    %16 = vector.broadcast %15 : vector<256x1xf32> to vector<256x256xf32>
    %17 = arith.mulf %7, %16 : vector<256x256xf32>
    %c0_6 = arith.constant 0 : index
    %c0_7 = arith.constant 0 : index
    %c0_8 = arith.constant 0 : index
    %18 = vector.load %arg4[%c0_6, %c0_7, %c0_8] : memref<1x1x256xf32, #tpu.memory_space<vmem>>, vector<1x1x256xf32>
    %19 = vector.shape_cast %18 : vector<1x1x256xf32> to vector<1x256xf32>
    %cst_9 = arith.constant 1.000000e+00 : f32
    %20 = vector.broadcast %cst_9 : f32 to vector<1x256xf32>
    %21 = arith.addf %20, %19 : vector<1x256xf32>
    %22 = vector.broadcast %21 : vector<1x256xf32> to vector<256x256xf32>
    %23 = arith.mulf %17, %22 : vector<256x256xf32>
    %c0_10 = arith.constant 0 : index
    %c0_11 = arith.constant 0 : index
    %c0_12 = arith.constant 0 : index
    %24 = vector.load %arg3[%c0_10, %c0_11, %c0_12] : memref<1x1x256xf32, #tpu.memory_space<vmem>>, vector<1x1x256xf32>
    %25 = vector.shape_cast %24 : vector<1x1x256xf32> to vector<1x256xf32>
    %26 = vector.broadcast %25 : vector<1x256xf32> to vector<256x256xf32>
    %27 = arith.addf %23, %26 : vector<256x256xf32>
    %28 = arith.truncf %27 : vector<256x256xf32> to vector<256x256xbf16>
    %c0_13 = arith.constant 0 : index
    %c0_14 = arith.constant 0 : index
    %29 = vector.load %arg5[%c0_13, %c0_14] : memref<256x128xbf16, #tpu.memory_space<vmem>>, vector<256x128xbf16>
    %cst_15 = arith.constant dense<0.000000e+00> : vector<256x128xf32>
    %30 = tpu.matmul %28, %29, %cst_15 {dimension_numbers = #tpu.dot_dimension_numbers<[1], [0], [0], [1], [0, 0, 1, 1], [], []>} : vector<256x256xbf16>, vector<256x128xbf16>, vector<256x128xf32> -> vector<256x128xf32>
    %c0_16 = arith.constant 0 : index
    %c0_17 = arith.constant 0 : index
    %31 = vector.load %arg6[%c0_16, %c0_17] : memref<1x128xf32, #tpu.memory_space<vmem>>, vector<1x128xf32>
    %32 = vector.broadcast %31 : vector<1x128xf32> to vector<256x128xf32>
    %33 = arith.addf %30, %32 : vector<256x128xf32>
    %c0_18 = arith.constant 0 : index
    %c0_19 = arith.constant 0 : index
    %c0_20 = arith.constant 0 : index
    %34 = vector.load %arg7[%c0_18, %c0_19, %c0_20] : memref<1x256x128xf32, #tpu.memory_space<vmem>>, vector<1x256x128xf32>
    %35 = vector.shape_cast %34 : vector<1x256x128xf32> to vector<256x128xf32>
    %36 = vector.shape_cast %33 : vector<256x128xf32> to vector<1x256x128xf32>
    tpu.vector_store %arg7[%c0_18, %c0_19, %c0_20], %36 {strides = array<i32>} : memref<1x256x128xf32, #tpu.memory_space<vmem>>, vector<1x256x128xf32>,
    return
  }
  func.func @transform_0(%arg0: i32, %arg1: i32) -> (i32, i32, i32) {
    %c0_i32 = arith.constant 0 : i32
    %c0_i32_0 = arith.constant 0 : i32
    return %arg0, %arg1, %c0_i32 : i32, i32, i32
  }
  func.func @transform_1(%arg0: i32, %arg1: i32) -> (i32, i32, i32) {
    %c0_i32 = arith.constant 0 : i32
    %c0_i32_0 = arith.constant 0 : i32
    %c0_i32_1 = arith.constant 0 : i32
    return %arg0, %c0_i32, %c0_i32_0 : i32, i32, i32
  }
  func.func @transform_2(%arg0: i32, %arg1: i32) -> (i32, i32, i32) {
    %c0_i32 = arith.constant 0 : i32
    %c0_i32_0 = arith.constant 0 : i32
    %c0_i32_1 = arith.constant 0 : i32
    return %arg0, %c0_i32, %c0_i32_0 : i32, i32, i32
  }
  func.func @transform_3(%arg0: i32, %arg1: i32) -> (i32, i32) {
    %c0_i32 = arith.constant 0 : i32
    %c0_i32_0 = arith.constant 0 : i32
    %c0_i32_1 = arith.constant 0 : i32
    return %c0_i32, %c0_i32_0 : i32, i32
  }
  func.func @transform_4(%arg0: i32, %arg1: i32) -> (i32, i32) {
    %c0_i32 = arith.constant 0 : i32
    %c0_i32_0 = arith.constant 0 : i32
    %c0_i32_1 = arith.constant 0 : i32
    return %c0_i32, %c0_i32_0 : i32, i32
  }
  func.func @transform_5(%arg0: i32, %arg1: i32) -> (i32, i32, i32) {
    %c0_i32 = arith.constant 0 : i32
    %c0_i32_0 = arith.constant 0 : i32
    return %arg0, %arg1, %c0_i32 : i32, i32, i32
  }
}

module attributes {stable_mosaic.version = 11 : i64} {
  func.func @_final_layer_kernel(%arg0: i32, %arg1: i32, %arg2: memref<1x256x256xf32, #tpu.memory_space<vmem>>, %arg3: memref<1x1x256xf32, #tpu.memory_space<vmem>>, %arg4: memref<1x1x256xf32, #tpu.memory_space<vmem>>, %arg5: memref<256x128xbf16, #tpu.memory_space<vmem>>, %arg6: memref<1x128xf32, #tpu.memory_space<vmem>>, %arg7: memref<1x256x128xf32, #tpu.memory_space<vmem>>) attributes {dimension_semantics = [#tpu.dimension_semantics<parallel>, #tpu.dimension_semantics<parallel>], iteration_bounds = array<i64: 2, 1>, scalar_prefetch = 0 : i64, scratch_operands = 0 : i64, tpu.core_type = #tpu.core_type<tc>, window_params = [{transform_indices = @transform_0, window_bounds = array<i64: 1, 256, 256>}, {transform_indices = @transform_1, window_bounds = array<i64: 1, 1, 256>}, {transform_indices = @transform_2, window_bounds = array<i64: 1, 1, 256>}, {pipeline_mode = #tpu.pipeline_mode<synchronous>, transform_indices = @transform_3, window_bounds = array<i64: 256, 128>}, {pipeline_mode = #tpu.pipeline_mode<synchronous>, transform_indices = @transform_4, window_bounds = array<i64: 1, 128>}, {transform_indices = @transform_5, window_bounds = array<i64: 1, 256, 128>}]} {
    %c0 = arith.constant 0 : index
    %c0_0 = arith.constant 0 : index
    %c0_1 = arith.constant 0 : index
    %0 = vector.load %arg2[%c0, %c0_0, %c0_1] : memref<1x256x256xf32, #tpu.memory_space<vmem>>, vector<1x256x256xf32>
    %1 = vector.shape_cast %0 : vector<1x256x256xf32> to vector<256x256xf32>
    %cst = arith.constant dense<0.000000e+00> : vector<256xf32>
    %2 = vector.multi_reduction <add>, %1, %cst [1] : vector<256x256xf32> to vector<256xf32>
    %3 = vector.shape_cast %2 : vector<256xf32> to vector<256x1xf32>
    %cst_2 = arith.constant 2.560000e+02 : f32
    %4 = vector.broadcast %cst_2 : f32 to vector<256x1xf32>
    %5 = arith.divf %3, %4 : vector<256x1xf32>
    %6 = vector.broadcast %5 : vector<256x1xf32> to vector<256x256xf32>
    %7 = arith.subf %1, %6 : vector<256x256xf32>
    %8 = arith.mulf %7, %7 : vector<256x256xf32>
    %cst_3 = arith.constant dense<0.000000e+00> : vector<256xf32>
    %9 = vector.multi_reduction <add>, %8, %cst_3 [1] : vector<256x256xf32> to vector<256xf32>
    %10 = vector.shape_cast %9 : vector<256xf32> to vector<256x1xf32>
    %cst_4 = arith.constant 2.560000e+02 : f32
    %11 = vector.broadcast %cst_4 : f32 to vector<256x1xf32>
    %12 = arith.divf %10, %11 : vector<256x1xf32>
    %cst_5 = arith.constant 9.99999997E-7 : f32
    %13 = vector.broadcast %cst_5 : f32 to vector<256x1xf32>
    %14 = arith.addf %12, %13 : vector<256x1xf32>
    %15 = math.rsqrt %14 : vector<256x1xf32>
    %16 = vector.broadcast %15 : vector<256x1xf32> to vector<256x256xf32>
    %17 = arith.mulf %7, %16 : vector<256x256xf32>
    %c0_6 = arith.constant 0 : index
    %c0_7 = arith.constant 0 : index
    %c0_8 = arith.constant 0 : index
    %18 = vector.load %arg4[%c0_6, %c0_7, %c0_8] : memref<1x1x256xf32, #tpu.memory_space<vmem>>, vector<1x1x256xf32>
    %19 = vector.shape_cast %18 : vector<1x1x256xf32> to vector<1x256xf32>
    %cst_9 = arith.constant 1.000000e+00 : f32
    %20 = vector.broadcast %cst_9 : f32 to vector<1x256xf32>
    %21 = arith.addf %20, %19 : vector<1x256xf32>
    %22 = vector.broadcast %21 : vector<1x256xf32> to vector<256x256xf32>
    %23 = arith.mulf %17, %22 : vector<256x256xf32>
    %c0_10 = arith.constant 0 : index
    %c0_11 = arith.constant 0 : index
    %c0_12 = arith.constant 0 : index
    %24 = vector.load %arg3[%c0_10, %c0_11, %c0_12] : memref<1x1x256xf32, #tpu.memory_space<vmem>>, vector<1x1x256xf32>
    %25 = vector.shape_cast %24 : vector<1x1x256xf32> to vector<1x256xf32>
    %26 = vector.broadcast %25 : vector<1x256xf32> to vector<256x256xf32>
    %27 = arith.addf %23, %26 : vector<256x256xf32>
    %28 = arith.truncf %27 : vector<256x256xf32> to vector<256x256xbf16>
    %c0_13 = arith.constant 0 : index
    %c0_14 = arith.constant 0 : index
    %29 = vector.load %arg5[%c0_13, %c0_14] : memref<256x128xbf16, #tpu.memory_space<vmem>>, vector<256x128xbf16>
    %cst_15 = arith.constant dense<0.000000e+00> : vector<256x128xf32>
    %30 = tpu.matmul %28, %29, %cst_15 {dimension_numbers = #tpu.dot_dimension_numbers<[1], [0], [0], [1], [0, 0, 1, 1], [], []>} : vector<256x256xbf16>, vector<256x128xbf16>, vector<256x128xf32> -> vector<256x128xf32>
    %c0_16 = arith.constant 0 : index
    %c0_17 = arith.constant 0 : index
    %31 = vector.load %arg6[%c0_16, %c0_17] : memref<1x128xf32, #tpu.memory_space<vmem>>, vector<1x128xf32>
    %32 = vector.broadcast %31 : vector<1x128xf32> to vector<256x128xf32>
    %33 = arith.addf %30, %32 : vector<256x128xf32>
    %c0_18 = arith.constant 0 : index
    %c0_19 = arith.constant 0 : index
    %c0_20 = arith.constant 0 : index
    %34 = vector.load %arg7[%c0_18, %c0_19, %c0_20] : memref<1x256x128xf32, #tpu.memory_space<vmem>>, vector<1x256x128xf32>
    %35 = vector.shape_cast %34 : vector<1x256x128xf32> to vector<256x128xf32>
    %36 = vector.shape_cast %33 : vector<256x128xf32> to vector<1x256x128xf32>
    tpu.vector_store %arg7[%c0_18, %c0_19, %c0_20], %36 {strides = array<i32>} : memref<1x256x128xf32, #tpu.memory_space<vmem>>, vector<1x256x128xf32>,
    return
  }
  func.func @transform_0(%arg0: i32, %arg1: i32) -> (i32, i32, i32) {
    %c0_i32 = arith.constant 0 : i32
    %c0_i32_0 = arith.constant 0 : i32
    return %arg0, %arg1, %c0_i32 : i32, i32, i32
  }
  func.func @transform_1(%arg0: i32, %arg1: i32) -> (i32, i32, i32) {
    %c0_i32 = arith.constant 0 : i32
    %c0_i32_0 = arith.constant 0 : i32
    %c0_i32_1 = arith.constant 0 : i32
    return %arg0, %c0_i32, %c0_i32_0 : i32, i32, i32
  }
  func.func @transform_2(%arg0: i32, %arg1: i32) -> (i32, i32, i32) {
    %c0_i32 = arith.constant 0 : i32
    %c0_i32_0 = arith.constant 0 : i32
    %c0_i32_1 = arith.constant 0 : i32
    return %arg0, %c0_i32, %c0_i32_0 : i32, i32, i32
  }
  func.func @transform_3(%arg0: i32, %arg1: i32) -> (i32, i32) {
    %c0_i32 = arith.constant 0 : i32
    %c0_i32_0 = arith.constant 0 : i32
    %c0_i32_1 = arith.constant 0 : i32
    return %c0_i32, %c0_i32_0 : i32, i32
  }
  func.func @transform_4(%arg0: i32, %arg1: i32) -> (i32, i32) {
    %c0_i32 = arith.constant 0 : i32
    %c0_i32_0 = arith.constant 0 : i32
    %c0_i32_1 = arith.constant 0 : i32
    return %c0_i32, %c0_i32_0 : i32, i32
  }
  func.func @transform_5(%arg0: i32, %arg1: i32) -> (i32, i32, i32) {
    %c0_i32 = arith.constant 0 : i32
    %c0_i32_0 = arith.constant 0 : i32
    return %arg0, %arg1, %c0_i32 : i32, i32, i32
  }
}

</mosaic_0001>

<llo_original>
// kernel: tpu_custom_call.1
$region0: #{tpu_custom_call.1}
  #allocation0 [shape = 'u32[]', space=smem, size = 0x4, offset = 0x4, fixed_abs, tag = 'smem constant byte address 0x4 - core index']
  #allocation1 [shape = 'u32[144,128]{1,0:T(1,128)}', space=vmem, size = 0x12000, scoped, tag = 'internal scratch']
  %s0 = inlined_call_operand.hbm [shape: f32[2,256,256], index: 0, kind: input, shape index: {}]
  %s1 = inlined_call_operand.hbm [shape: f32[2,1,256], index: 1, kind: input, shape index: {}]
  %s2 = inlined_call_operand.hbm [shape: f32[2,1,256], index: 2, kind: input, shape index: {}]
  %s3 = inlined_call_operand.hbm [shape: bf16[256,128], index: 3, kind: input, shape index: {}]
  %s4 = inlined_call_operand.vmem [shape: f32[1,128], index: 4, kind: input, shape index: {}]
  %s5 = inlined_call_operand.hbm [shape: f32[2,256,128], index: 5, kind: output, shape index: {}]
  %s6 = sld [smem:[#allocation0]]
  $region69: #{tpu_custom_call.1} parent=0
    _
  %s8 = ssub.s32 1, %s6
  %s9 = scalar_select 0, %s8, %s6
  $region1: #{tpu_custom_call.1} parent=0
    #allocation2 [shape = 'u8[524288]{0}', space=vmem, size = 0x80000, scoped, tag = 'input window, operand 0']
    #allocation3 [shape = 's32[2]{0}', space=sflag, size = 0x8, scoped, tag = 'scoped memory for tpu_custom_call.1']
    #allocation4 [shape = 's32[2]{0}', space=sflag, size = 0x8, scoped, tag = 'scoped memory for tpu_custom_call.1']
    #allocation5 [shape = 'u8[2048]{0}', space=vmem, size = 0x800, scoped, tag = 'input window, operand 1']
    #allocation6 [shape = 's32[2]{0}', space=sflag, size = 0x8, scoped, tag = 'scoped memory for tpu_custom_call.1']
    #allocation7 [shape = 'u8[2048]{0}', space=vmem, size = 0x800, scoped, tag = 'input window, operand 2']
    #allocation8 [shape = 'u8[65536]{0}', space=vmem, size = 0x10000, scoped, tag = 'input window, operand 3, single buffered']
    #allocation9 [shape = 's32[1]{0}', space=sflag, size = 0x4, scoped, tag = 'scoped memory for tpu_custom_call.1']
    #allocation10 [shape = 'u8[262144]{0}', space=vmem, size = 0x40000, scoped, tag = 'output window, operand 0']
    %10 = vsyncpa [#allocation3], 0
    %s11 = scalar_lea.sflag [#allocation3], 1
    %12 = vsyncpa %s11, 0
    %13 = vsyncpa [#allocation6], 0
    %s14 = scalar_lea.sflag [#allocation6], 1
    %15 = vsyncpa %s14, 0
    %16 = vsyncpa [#allocation9], 0
    %17 = vsyncpa [#allocation4], 0
    %s18 = scalar_lea.sflag [#allocation4], 1
    %19 = vsyncpa %s18, 0
    loop: start=0, step=1, limit=4
    $region2: #{tpu_custom_call.1} parent=1 // loop_pre_header
      _
    $region3: #{tpu_custom_call.1} parent=1 // loop_header
      %s21 = sphi 0, %s25
      %p22 = scmp.ge.s32.totalorder %s21, 4
      %s28 = sphi 0, %s40
      %s29 = sphi 0, %s36
      %s30 = sphi 0, %s28
      %s31 = sphi 0, %s29
      %s32 = sphi 0, %s30
      %s33 = sphi 0, %s31
      %s45 = sphi 0, %s47
      %s48 = sphi 0, %s45
      %s49 = sphi 0, %s48
      %s65 = sphi 0, %s49
      %s71 = sphi 0, %s73
      %s74 = sphi 0, %s71
      %s75 = sphi 0, %s74
      %s91 = sphi 0, %s75
      %s97 = sphi 0, %s99
      %s100 = sphi 0, %s97
      %s101 = sphi 0, %s100
      %s117 = sphi 0, %s101
      %s121 = sphi 0, %s121
      %s123 = sphi 0, %s121
      %s124 = sphi 0, %s123
      %s138 = sphi 0, %s124
      %s142 = sphi 0, %s142
      %s144 = sphi 0, %s142
      %s145 = sphi 0, %s144
      %s159 = sphi 0, %s145
      %s167 = sphi 0, %s169
      %s170 = sphi 0, %s167
      %s171 = sphi 0, %s170
      %s187 = sphi 0, %s171
    $region4: #{tpu_custom_call.1} parent=1 // loop_header_branch
      %24 = sbr.rel (%p22) target = $region8
    $region5: #{tpu_custom_call.1} parent=1 // loop_body
      %s26 = ssub.s32 %s21, 1
      %s27 = ssub.s32 %s21, 2
      %s34 = sadd.s32 1, %s29
      %p35 = scmp.ge.s32.totalorder %s34, 1
      %s36 = scalar_select %p35, 0, %s34
      %s37 = sadd.s32 1, %s28
      %s38 = scalar_select %p35, %s37, %s28
      %p39 = scmp.ge.s32.totalorder %s38, 2
      %s40 = scalar_select %p39, 0, %s38
      %s41 = ssub.s32 %s28, %s40
      %s42 = ssub.s32 %s29, %s36
      %s43 = sor.u32 %s41, %s42
      %p44 = scmp.eq.s32.totalorder %s43, 0
      %s46 = sadd.s32 %s45, 1
      %s47 = scalar_select %p44, %s45, %s46
      %p50 = pneg %p44
      %p51 = scmp.eq.s32.totalorder %s21, 1
      %p52 = por %p50, %p51
      %p53 = scmp.ne.s32.totalorder %s45, %s48
      %p54 = scmp.eq.s32.totalorder %s21, 0
      %p55 = por %p53, %p54
      %p56 = scmp.ne.s32.totalorder %s45, %s48
      %p57 = scmp.eq.s32.totalorder %s26, 1
      %p58 = por %p56, %p57
      %p59 = scmp.ne.s32.totalorder %s48, %s49
      %p60 = scmp.eq.s32.totalorder %s26, 0
      %p61 = por %p59, %p60
      %p62 = scmp.ne.s32.totalorder %s48, %s49
      %p63 = scmp.eq.s32.totalorder %s27, 1
      %p64 = por %p62, %p63
      %p66 = scmp.ne.s32.totalorder %s49, %s65
      %p67 = scmp.eq.s32.totalorder %s27, 0
      %p68 = por %p66, %p67
      %s69 = ssub.s32 %s28, %s40
      %p70 = scmp.eq.s32.totalorder %s69, 0
      %s72 = sadd.s32 %s71, 1
      %s73 = scalar_select %p70, %s71, %s72
      %p76 = pneg %p70
      %p77 = scmp.eq.s32.totalorder %s21, 1
      %p78 = por %p76, %p77
      %p79 = scmp.ne.s32.totalorder %s71, %s74
      %p80 = scmp.eq.s32.totalorder %s21, 0
      %p81 = por %p79, %p80
      %p82 = scmp.ne.s32.totalorder %s71, %s74
      %p83 = scmp.eq.s32.totalorder %s26, 1
      %p84 = por %p82, %p83
      %p85 = scmp.ne.s32.totalorder %s74, %s75
      %p86 = scmp.eq.s32.totalorder %s26, 0
      %p87 = por %p85, %p86
      %p88 = scmp.ne.s32.totalorder %s74, %s75
      %p89 = scmp.eq.s32.totalorder %s27, 1
      %p90 = por %p88, %p89
      %p92 = scmp.ne.s32.totalorder %s75, %s91
      %p93 = scmp.eq.s32.totalorder %s27, 0
      %p94 = por %p92, %p93
      %s95 = ssub.s32 %s28, %s40
      %p96 = scmp.eq.s32.totalorder %s95, 0
      %s98 = sadd.s32 %s97, 1
      %s99 = scalar_select %p96, %s97, %s98
      %p102 = pneg %p96
      %p103 = scmp.eq.s32.totalorder %s21, 1
      %p104 = por %p102, %p103
      %p105 = scmp.ne.s32.totalorder %s97, %s100
      %p106 = scmp.eq.s32.totalorder %s21, 0
      %p107 = por %p105, %p106
      %p108 = scmp.ne.s32.totalorder %s97, %s100
      %p109 = scmp.eq.s32.totalorder %s26, 1
      %p110 = por %p108, %p109
      %p111 = scmp.ne.s32.totalorder %s100, %s101
      %p112 = scmp.eq.s32.totalorder %s26, 0
      %p113 = por %p111, %p112
      %p114 = scmp.ne.s32.totalorder %s100, %s101
      %p115 = scmp.eq.s32.totalorder %s27, 1
      %p116 = por %p114, %p115
      %p118 = scmp.ne.s32.totalorder %s101, %s117
      %p119 = scmp.eq.s32.totalorder %s27, 0
      %p120 = por %p118, %p119
      %s122 = sadd.s32 %s121, 1
      %p125 = scmp.eq.s32.totalorder %s21, 1
      %p126 = scmp.ne.s32.totalorder %s121, %s123
      %p127 = scmp.eq.s32.totalorder %s21, 0
      %p128 = por %p126, %p127
      %p129 = scmp.ne.s32.totalorder %s121, %s123
      %p130 = scmp.eq.s32.totalorder %s26, 1
      %p131 = por %p129, %p130
      %p132 = scmp.ne.s32.totalorder %s123, %s124
      %p133 = scmp.eq.s32.totalorder %s26, 0
      %p134 = por %p132, %p133
      %p135 = scmp.ne.s32.totalorder %s123, %s124
      %p136 = scmp.eq.s32.totalorder %s27, 1
      %p137 = por %p135, %p136
      %p139 = scmp.ne.s32.totalorder %s124, %s138
      %p140 = scmp.eq.s32.totalorder %s27, 0
      %p141 = por %p139, %p140
      %s143 = sadd.s32 %s142, 1
      %p146 = scmp.eq.s32.totalorder %s21, 1
      %p147 = scmp.ne.s32.totalorder %s142, %s144
      %p148 = scmp.eq.s32.totalorder %s21, 0
      %p149 = por %p147, %p148
      %p150 = scmp.ne.s32.totalorder %s142, %s144
      %p151 = scmp.eq.s32.totalorder %s26, 1
      %p152 = por %p150, %p151
      %p153 = scmp.ne.s32.totalorder %s144, %s145
      %p154 = scmp.eq.s32.totalorder %s26, 0
      %p155 = por %p153, %p154
      %p156 = scmp.ne.s32.totalorder %s144, %s145
      %p157 = scmp.eq.s32.totalorder %s27, 1
      %p158 = por %p156, %p157
      %p160 = scmp.ne.s32.totalorder %s145, %s159
      %p161 = scmp.eq.s32.totalorder %s27, 0
      %p162 = por %p160, %p161
      %s163 = ssub.s32 %s28, %s40
      %s164 = ssub.s32 %s29, %s36
      %s165 = sor.u32 %s163, %s164
      %p166 = scmp.eq.s32.totalorder %s165, 0
      %s168 = sadd.s32 %s167, 1
      %s169 = scalar_select %p166, %s167, %s168
      %p172 = pneg %p166
      %p173 = scmp.eq.s32.totalorder %s21, 1
      %p174 = por %p172, %p173
      %p175 = scmp.ne.s32.totalorder %s167, %s170
      %p176 = scmp.eq.s32.totalorder %s21, 0
      %p177 = por %p175, %p176
      %p178 = scmp.ne.s32.totalorder %s167, %s170
      %p179 = scmp.eq.s32.totalorder %s26, 1
      %p180 = por %p178, %p179
      %p181 = scmp.ne.s32.totalorder %s170, %s171
      %p182 = scmp.eq.s32.totalorder %s26, 0
      %p183 = por %p181, %p182
      %p184 = scmp.ne.s32.totalorder %s170, %s171
      %p185 = scmp.eq.s32.totalorder %s27, 1
      %p186 = por %p184, %p185
      %p188 = scmp.ne.s32.totalorder %s171, %s187
      %p189 = scmp.eq.s32.totalorder %s27, 0
      %p190 = por %p188, %p189
      %p191 = scmp.le.s32.totalorder 1, %s21
      %p192 = scmp.lt.s32.totalorder %s21, 3
      %p193 = pnand %p191, %p192
      %p194 = pneg %p193
      // Predicated region
      $region9: #{tpu_custom_call.1} parent=5 // pred_check
        _
      $region10: #{tpu_custom_call.1} parent=5 // pred_check_branch
        %196 = sbr.rel (%p193) target = $region12
      $region11: #{tpu_custom_call.1} parent=5 // pred_region
        %s197 = ssub.s32 %s21, 1
        // Predicated region
        $region13: #{tpu_custom_call.1} parent=11 // pred_check
          %p198 = pneg %p134
        $region14: #{tpu_custom_call.1} parent=11 // pred_check_branch
          %200 = sbr.rel (%p198) target = $region16
        $region15: #{tpu_custom_call.1} parent=11 // pred_region
          %s202 = ssub.s32 2048, 2048
          %203 = vsyncadd [#allocation9], %s202
          %s204 = sshll.u32 [#allocation8], 4
          %s205 = int_to_ptr.vmem [resolvable:$true] %s204
          %210 = dma.hbm_to_vmem [thread:$0]  %s3, 2048, %s205, [#allocation9], 64, 64, 4
        $region16: #{tpu_custom_call.1} parent=11 // pred_fallthru
          _
        // Predicated region
        $region17: #{tpu_custom_call.1} parent=11 // pred_check
          %p211 = pneg %p155
        $region18: #{tpu_custom_call.1} parent=11 // pred_check_branch
          %213 = sbr.rel (%p211) target = $region20
        $region19: #{tpu_custom_call.1} parent=11 // pred_region
          _
        $region20: #{tpu_custom_call.1} parent=11 // pred_fallthru
          _
      $region12: #{tpu_custom_call.1} parent=5 // pred_fallthru
        _
      %p214 = scmp.lt.s32.totalorder %s21, 2
      // Predicated region
      $region21: #{tpu_custom_call.1} parent=5 // pred_check
        %p215 = pneg %p214
      $region22: #{tpu_custom_call.1} parent=5 // pred_check_branch
        %217 = sbr.rel (%p215) target = $region24
      $region23: #{tpu_custom_call.1} parent=5 // pred_region
        // Predicated region
        $region25: #{tpu_custom_call.1} parent=23 // pred_check
          %p218 = pneg %p55
        $region26: #{tpu_custom_call.1} parent=23 // pred_check_branch
          %220 = sbr.rel (%p218) target = $region28
        $region27: #{tpu_custom_call.1} parent=23 // pred_region
          %s221 = sand.u32 %s45, 1
          %s222 = scalar_lea.sflag [#allocation3], %s221
          %s223 = sand.u32 %s45, 1
          %s224 = smul.addr %s223, 512
          %s225 = scalar_lea.vmem [#allocation2], %s224
          %s226 = smul.u32 32, %s29
          %s228 = ssub.s32 8192, 8192
          %229 = vsyncadd %s222, %s228
          %s230 = smul.addr %s226, 2
          %s231 = smul.addr %s28, 64
          %s232 = sadd.s32 %s230, %s231
          %s233 = smul.addr %s232, 128
          %s234 = scalar_lea.hbm %s0, %s233
          %s235 = sshll.u32 %s225, 4
          %s236 = int_to_ptr.vmem [resolvable:$true] %s235
          %241 = dma.hbm_to_vmem [thread:$0]  %s234, 8192, %s236, %s222, 256, 256, 16
        $region28: #{tpu_custom_call.1} parent=23 // pred_fallthru
          _
        // Predicated region
        $region29: #{tpu_custom_call.1} parent=23 // pred_check
          %p242 = pneg %p81
        $region30: #{tpu_custom_call.1} parent=23 // pred_check_branch
          %244 = sbr.rel (%p242) target = $region32
        $region31: #{tpu_custom_call.1} parent=23 // pred_region
          %s245 = sand.u32 %s21, 1
          %s246 = scalar_lea.sflag [#allocation6], %s245
          %s247 = sand.u32 %s71, 1
          %s248 = smul.addr %s247, 2
          %s249 = scalar_lea.vmem [#allocation5], %s248
          %s251 = ssub.s32 32, 32
          %252 = vsyncadd %s246, %s251
          %s253 = smul.addr %s28, 2
          %s254 = smul.addr %s253, 16
          %s255 = scalar_lea.hbm %s1, %s254
          %s257 = sshll.u32 %s249, 4
          %s258 = int_to_ptr.vmem [resolvable:$true] %s257
          %260 = dma.hbm_to_vmem [thread:$0]  %s255, 32, %s258, %s246
        $region32: #{tpu_custom_call.1} parent=23 // pred_fallthru
          _
        // Predicated region
        $region33: #{tpu_custom_call.1} parent=23 // pred_check
          %p261 = pneg %p107
        $region34: #{tpu_custom_call.1} parent=23 // pred_check_branch
          %263 = sbr.rel (%p261) target = $region36
        $region35: #{tpu_custom_call.1} parent=23 // pred_region
          %s264 = sand.u32 %s21, 1
          %s265 = scalar_lea.sflag [#allocation6], %s264
          %s266 = sand.u32 %s97, 1
          %s267 = smul.addr %s266, 2
          %s268 = scalar_lea.vmem [#allocation7], %s267
          %s270 = ssub.s32 32, 32
          %271 = vsyncadd %s265, %s270
          %s272 = smul.addr %s28, 2
          %s273 = smul.addr %s272, 16
          %s274 = scalar_lea.hbm %s2, %s273
          %s276 = sshll.u32 %s268, 4
          %s277 = int_to_ptr.vmem [resolvable:$true] %s276
          %279 = dma.hbm_to_vmem [thread:$0]  %s274, 32, %s277, %s265
        $region36: #{tpu_custom_call.1} parent=23 // pred_fallthru
          _
      $region24: #{tpu_custom_call.1} parent=5 // pred_fallthru
        _
      %p280 = scmp.le.s32.totalorder 1, %s21
      %p281 = scmp.lt.s32.totalorder %s21, 3
      %p282 = pnand %p280, %p281
      %p283 = pneg %p282
      // Predicated region
      $region37: #{tpu_custom_call.1} parent=5 // pred_check
        _
      $region38: #{tpu_custom_call.1} parent=5 // pred_check_branch
        %285 = sbr.rel (%p282) target = $region40
      $region39: #{tpu_custom_call.1} parent=5 // pred_region
        %s286 = ssub.s32 %s21, 1
        %s287 = sand.u32 %s48, 1
        %s288 = scalar_lea.sflag [#allocation3], %s287
        %s289 = sand.u32 %s48, 1
        %s290 = smul.addr %s289, 512
        %s291 = scalar_lea.vmem [#allocation2], %s290
        // Predicated region
        $region41: #{tpu_custom_call.1} parent=39 // pred_check
          %p292 = pneg %p61
        $region42: #{tpu_custom_call.1} parent=39 // pred_check_branch
          %294 = sbr.rel (%p292) target = $region44
        $region43: #{tpu_custom_call.1} parent=39 // pred_region
          %295 = dma.done %s288, 8192
        $region44: #{tpu_custom_call.1} parent=39 // pred_fallthru
          _
        %s296 = sand.u32 %s26, 1
        %s297 = scalar_lea.sflag [#allocation6], %s296
        %s298 = sand.u32 %s74, 1
        %s299 = smul.addr %s298, 2
        %s300 = scalar_lea.vmem [#allocation5], %s299
        // Predicated region
        $region45: #{tpu_custom_call.1} parent=39 // pred_check
          %p301 = pneg %p87
        $region46: #{tpu_custom_call.1} parent=39 // pred_check_branch
          %303 = sbr.rel (%p301) target = $region48
        $region47: #{tpu_custom_call.1} parent=39 // pred_region
          %304 = dma.done %s297, 32
        $region48: #{tpu_custom_call.1} parent=39 // pred_fallthru
          _
        %s305 = sand.u32 %s26, 1
        %s306 = scalar_lea.sflag [#allocation6], %s305
        %s307 = sand.u32 %s100, 1
        %s308 = smul.addr %s307, 2
        %s309 = scalar_lea.vmem [#allocation7], %s308
        // Predicated region
        $region49: #{tpu_custom_call.1} parent=39 // pred_check
          %p310 = pneg %p113
        $region50: #{tpu_custom_call.1} parent=39 // pred_check_branch
          %312 = sbr.rel (%p310) target = $region52
        $region51: #{tpu_custom_call.1} parent=39 // pred_region
          %313 = dma.done %s306, 32
        $region52: #{tpu_custom_call.1} parent=39 // pred_fallthru
          _
        // Predicated region
        $region53: #{tpu_custom_call.1} parent=39 // pred_check
          %p314 = pneg %p134
        $region54: #{tpu_custom_call.1} parent=39 // pred_check_branch
          %316 = sbr.rel (%p314) target = $region56
        $region55: #{tpu_custom_call.1} parent=39 // pred_region
          %317 = dma.done [#allocation9], 2048
        $region56: #{tpu_custom_call.1} parent=39 // pred_fallthru
          _
        %s318 = sand.u32 %s48, 1
        %s319 = scalar_lea.sflag [#allocation3], %s318
        %s320 = sand.u32 %s48, 1
        %s321 = smul.addr %s320, 512
        %s322 = scalar_lea.vmem [#allocation2], %s321
        %p323 = pneg %p61
        %p324 = pneg %p58
        %s325 = sand.u32 %s26, 1
        %s326 = scalar_lea.sflag [#allocation6], %s325
        %s327 = sand.u32 %s74, 1
        %s328 = smul.addr %s327, 2
        %s329 = scalar_lea.vmem [#allocation5], %s328
        %p330 = pneg %p87
        %p331 = pneg %p84
        %s332 = sand.u32 %s26, 1
        %s333 = scalar_lea.sflag [#allocation6], %s332
        %s334 = sand.u32 %s100, 1
        %s335 = smul.addr %s334, 2
        %s336 = scalar_lea.vmem [#allocation7], %s335
        %p337 = pneg %p113
        %p338 = pneg %p110
        %p339 = pneg %p134
        %p340 = pneg %p131
        %p341 = pneg %p155
        %p342 = pneg %p152
        %p343 = pneg %p183
        %p344 = pneg %p180
        %s345 = sand.u32 %s170, 1
        %s346 = scalar_lea.sflag [#allocation4], %s345
        %s347 = sand.u32 %s170, 1
        %s348 = smul.addr %s347, 256
        %s349 = scalar_lea.vmem [#allocation10], %s348
        %s350 = smul.u32 32, %s31
        %s351 = smul.u32 32, %s31
        %v353 = vld [vmem:[%s291] sm:$0xff]
        %v354 = vld [vmem:[%s291 + $0x8] sm:$0xff]
        %v355 = vld [vmem:[%s291 + $0x10] sm:$0xff]
        %v356 = vld [vmem:[%s291 + $0x18] sm:$0xff]
        %v357 = vld [vmem:[%s291 + $0x20] sm:$0xff]
        %v358 = vld [vmem:[%s291 + $0x28] sm:$0xff]
        %v359 = vld [vmem:[%s291 + $0x30] sm:$0xff]
        %v360 = vld [vmem:[%s291 + $0x38] sm:$0xff]
        %v361 = vld [vmem:[%s291 + $0x40] sm:$0xff]
        %v362 = vld [vmem:[%s291 + $0x48] sm:$0xff]
        %v363 = vld [vmem:[%s291 + $0x50] sm:$0xff]
        %v364 = vld [vmem:[%s291 + $0x58] sm:$0xff]
        %v365 = vld [vmem:[%s291 + $0x60] sm:$0xff]
        %v366 = vld [vmem:[%s291 + $0x68] sm:$0xff]
        %v367 = vld [vmem:[%s291 + $0x70] sm:$0xff]
        %v368 = vld [vmem:[%s291 + $0x78] sm:$0xff]
        %v369 = vld [vmem:[%s291 + $0x80] sm:$0xff]
        %v370 = vld [vmem:[%s291 + $0x88] sm:$0xff]
        %v371 = vld [vmem:[%s291 + $0x90] sm:$0xff]
        %v372 = vld [vmem:[%s291 + $0x98] sm:$0xff]
        %v373 = vld [vmem:[%s291 + $0xa0] sm:$0xff]
        %v374 = vld [vmem:[%s291 + $0xa8] sm:$0xff]
        %v375 = vld [vmem:[%s291 + $0xb0] sm:$0xff]
        %v376 = vld [vmem:[%s291 + $0xb8] sm:$0xff]
        %v377 = vld [vmem:[%s291 + $0xc0] sm:$0xff]
        %v378 = vld [vmem:[%s291 + $0xc8] sm:$0xff]
        %v379 = vld [vmem:[%s291 + $0xd0] sm:$0xff]
        %v380 = vld [vmem:[%s291 + $0xd8] sm:$0xff]
        %v381 = vld [vmem:[%s291 + $0xe0] sm:$0xff]
        %v382 = vld [vmem:[%s291 + $0xe8] sm:$0xff]
        %v383 = vld [vmem:[%s291 + $0xf0] sm:$0xff]
        %v384 = vld [vmem:[%s291 + $0xf8] sm:$0xff]
        %v385 = vld [vmem:[%s291 + $0x100] sm:$0xff]
        %v386 = vld [vmem:[%s291 + $0x108] sm:$0xff]
        %v387 = vld [vmem:[%s291 + $0x110] sm:$0xff]
        %v388 = vld [vmem:[%s291 + $0x118] sm:$0xff]
        %v389 = vld [vmem:[%s291 + $0x120] sm:$0xff]
        %v390 = vld [vmem:[%s291 + $0x128] sm:$0xff]
        %v391 = vld [vmem:[%s291 + $0x130] sm:$0xff]
        %v392 = vld [vmem:[%s291 + $0x138] sm:$0xff]
        %v393 = vld [vmem:[%s291 + $0x140] sm:$0xff]
        %v394 = vld [vmem:[%s291 + $0x148] sm:$0xff]
        %v395 = vld [vmem:[%s291 + $0x150] sm:$0xff]
        %v396 = vld [vmem:[%s291 + $0x158] sm:$0xff]
        %v397 = vld [vmem:[%s291 + $0x160] sm:$0xff]
        %v398 = vld [vmem:[%s291 + $0x168] sm:$0xff]
        %v399 = vld [vmem:[%s291 + $0x170] sm:$0xff]
        %v400 = vld [vmem:[%s291 + $0x178] sm:$0xff]
        %v401 = vld [vmem:[%s291 + $0x180] sm:$0xff]
        %v402 = vld [vmem:[%s291 + $0x188] sm:$0xff]
        %v403 = vld [vmem:[%s291 + $0x190] sm:$0xff]
        %v404 = vld [vmem:[%s291 + $0x198] sm:$0xff]
        %v405 = vld [vmem:[%s291 + $0x1a0] sm:$0xff]
        %v406 = vld [vmem:[%s291 + $0x1a8] sm:$0xff]
        %v407 = vld [vmem:[%s291 + $0x1b0] sm:$0xff]
        %v408 = vld [vmem:[%s291 + $0x1b8] sm:$0xff]
        %v409 = vld [vmem:[%s291 + $0x1c0] sm:$0xff]
        %v410 = vld [vmem:[%s291 + $0x1c8] sm:$0xff]
        %v411 = vld [vmem:[%s291 + $0x1d0] sm:$0xff]
        %v412 = vld [vmem:[%s291 + $0x1d8] sm:$0xff]
        %v413 = vld [vmem:[%s291 + $0x1e0] sm:$0xff]
        %v414 = vld [vmem:[%s291 + $0x1e8] sm:$0xff]
        %v415 = vld [vmem:[%s291 + $0x1f0] sm:$0xff]
        %v416 = vld [vmem:[%s291 + $0x1f8] sm:$0xff]
        %v417 = vadd.f32 %v353, %v354
        %418 = vadd.xlane.f32.xlu0 %v417
        %v419 = vpop.xlane.xlu0 %418
        %v420 = vadd.f32 %v355, %v356
        %421 = vadd.xlane.f32.xlu0 %v420
        %v422 = vpop.xlane.xlu0 %421
        %v423 = vadd.f32 %v357, %v358
        %424 = vadd.xlane.f32.xlu0 %v423
        %v425 = vpop.xlane.xlu0 %424
        %v426 = vadd.f32 %v359, %v360
        %427 = vadd.xlane.f32.xlu0 %v426
        %v428 = vpop.xlane.xlu0 %427
        %v429 = vadd.f32 %v361, %v362
        %430 = vadd.xlane.f32.xlu0 %v429
        %v431 = vpop.xlane.xlu0 %430
        %v432 = vadd.f32 %v363, %v364
        %433 = vadd.xlane.f32.xlu0 %v432
        %v434 = vpop.xlane.xlu0 %433
        %v435 = vadd.f32 %v365, %v366
        %436 = vadd.xlane.f32.xlu0 %v435
        %v437 = vpop.xlane.xlu0 %436
        %v438 = vadd.f32 %v367, %v368
        %439 = vadd.xlane.f32.xlu0 %v438
        %v440 = vpop.xlane.xlu0 %439
        %v441 = vadd.f32 %v369, %v370
        %442 = vadd.xlane.f32.xlu0 %v441
        %v443 = vpop.xlane.xlu0 %442
        %v444 = vadd.f32 %v371, %v372
        %445 = vadd.xlane.f32.xlu0 %v444
        %v446 = vpop.xlane.xlu0 %445
        %v447 = vadd.f32 %v373, %v374
        %448 = vadd.xlane.f32.xlu0 %v447
        %v449 = vpop.xlane.xlu0 %448
        %v450 = vadd.f32 %v375, %v376
        %451 = vadd.xlane.f32.xlu0 %v450
        %v452 = vpop.xlane.xlu0 %451
        %v453 = vadd.f32 %v377, %v378
        %454 = vadd.xlane.f32.xlu0 %v453
        %v455 = vpop.xlane.xlu0 %454
        %v456 = vadd.f32 %v379, %v380
        %457 = vadd.xlane.f32.xlu0 %v456
        %v458 = vpop.xlane.xlu0 %457
        %v459 = vadd.f32 %v381, %v382
        %460 = vadd.xlane.f32.xlu0 %v459
        %v461 = vpop.xlane.xlu0 %460
        %v462 = vadd.f32 %v383, %v384
        %463 = vadd.xlane.f32.xlu0 %v462
        %v464 = vpop.xlane.xlu0 %463
        %v465 = vadd.f32 %v385, %v386
        %466 = vadd.xlane.f32.xlu0 %v465
        %v467 = vpop.xlane.xlu0 %466
        %v468 = vadd.f32 %v387, %v388
        %469 = vadd.xlane.f32.xlu0 %v468
        %v470 = vpop.xlane.xlu0 %469
        %v471 = vadd.f32 %v389, %v390
        %472 = vadd.xlane.f32.xlu0 %v471
        %v473 = vpop.xlane.xlu0 %472
        %v474 = vadd.f32 %v391, %v392
        %475 = vadd.xlane.f32.xlu0 %v474
        %v476 = vpop.xlane.xlu0 %475
        %v477 = vadd.f32 %v393, %v394
        %478 = vadd.xlane.f32.xlu0 %v477
        %v479 = vpop.xlane.xlu0 %478
        %v480 = vadd.f32 %v395, %v396
        %481 = vadd.xlane.f32.xlu0 %v480
        %v482 = vpop.xlane.xlu0 %481
        %v483 = vadd.f32 %v397, %v398
        %484 = vadd.xlane.f32.xlu0 %v483
        %v485 = vpop.xlane.xlu0 %484
        %v486 = vadd.f32 %v399, %v400
        %487 = vadd.xlane.f32.xlu0 %v486
        %v488 = vpop.xlane.xlu0 %487
        %v489 = vadd.f32 %v401, %v402
        %490 = vadd.xlane.f32.xlu0 %v489
        %v491 = vpop.xlane.xlu0 %490
        %v492 = vadd.f32 %v403, %v404
        %493 = vadd.xlane.f32.xlu0 %v492
        %v494 = vpop.xlane.xlu0 %493
        %v495 = vadd.f32 %v405, %v406
        %496 = vadd.xlane.f32.xlu0 %v495
        %v497 = vpop.xlane.xlu0 %496
        %v498 = vadd.f32 %v407, %v408
        %499 = vadd.xlane.f32.xlu0 %v498
        %v500 = vpop.xlane.xlu0 %499
        %v501 = vadd.f32 %v409, %v410
        %502 = vadd.xlane.f32.xlu0 %v501
        %v503 = vpop.xlane.xlu0 %502
        %v504 = vadd.f32 %v411, %v412
        %505 = vadd.xlane.f32.xlu0 %v504
        %v506 = vpop.xlane.xlu0 %505
        %v507 = vadd.f32 %v413, %v414
        %508 = vadd.xlane.f32.xlu0 %v507
        %v509 = vpop.xlane.xlu0 %508
        %v510 = vadd.f32 %v415, %v416
        %511 = vadd.xlane.f32.xlu0 %v510
        %v512 = vpop.xlane.xlu0 %511
        %v513 = vrcp.pop 256.0
        %v514 = vmul.f32 %v419, %v513
        %v515 = vmul.f32 %v422, %v513
        %v516 = vmul.f32 %v425, %v513
        %v517 = vmul.f32 %v428, %v513
        %v518 = vmul.f32 %v431, %v513
        %v519 = vmul.f32 %v434, %v513
        %v520 = vmul.f32 %v437, %v513
        %v521 = vmul.f32 %v440, %v513
        %v522 = vmul.f32 %v443, %v513
        %v523 = vmul.f32 %v446, %v513
        %v524 = vmul.f32 %v449, %v513
        %v525 = vmul.f32 %v452, %v513
        %v526 = vmul.f32 %v455, %v513
        %v527 = vmul.f32 %v458, %v513
        %v528 = vmul.f32 %v461, %v513
        %v529 = vmul.f32 %v464, %v513
        %v530 = vmul.f32 %v467, %v513
        %v531 = vmul.f32 %v470, %v513
        %v532 = vmul.f32 %v473, %v513
        %v533 = vmul.f32 %v476, %v513
        %v534 = vmul.f32 %v479, %v513
        %v535 = vmul.f32 %v482, %v513
        %v536 = vmul.f32 %v485, %v513
        %v537 = vmul.f32 %v488, %v513
        %v538 = vmul.f32 %v491, %v513
        %v539 = vmul.f32 %v494, %v513
        %v540 = vmul.f32 %v497, %v513
        %v541 = vmul.f32 %v500, %v513
        %v542 = vmul.f32 %v503, %v513
        %v543 = vmul.f32 %v506, %v513
        %v544 = vmul.f32 %v509, %v513
        %v545 = vmul.f32 %v512, %v513
        %v546 = vsub.f32 %v353, %v514
        %v547 = vsub.f32 %v354, %v514
        %v548 = vsub.f32 %v355, %v515
        %v549 = vsub.f32 %v356, %v515
        %v550 = vsub.f32 %v357, %v516
        %v551 = vsub.f32 %v358, %v516
        %v552 = vsub.f32 %v359, %v517
        %v553 = vsub.f32 %v360, %v517
        %v554 = vsub.f32 %v361, %v518
        %v555 = vsub.f32 %v362, %v518
        %v556 = vsub.f32 %v363, %v519
        %v557 = vsub.f32 %v364, %v519
        %v558 = vsub.f32 %v365, %v520
        %v559 = vsub.f32 %v366, %v520
        %v560 = vsub.f32 %v367, %v521
        %v561 = vsub.f32 %v368, %v521
        %v562 = vsub.f32 %v369, %v522
        %v563 = vsub.f32 %v370, %v522
        %v564 = vsub.f32 %v371, %v523
        %v565 = vsub.f32 %v372, %v523
        %v566 = vsub.f32 %v373, %v524
        %v567 = vsub.f32 %v374, %v524
        %v568 = vsub.f32 %v375, %v525
        %v569 = vsub.f32 %v376, %v525
        %v570 = vsub.f32 %v377, %v526
        %v571 = vsub.f32 %v378, %v526
        %v572 = vsub.f32 %v379, %v527
        %v573 = vsub.f32 %v380, %v527
        %v574 = vsub.f32 %v381, %v528
        %v575 = vsub.f32 %v382, %v528
        %v576 = vsub.f32 %v383, %v529
        %v577 = vsub.f32 %v384, %v529
        %v578 = vsub.f32 %v385, %v530
        %v579 = vsub.f32 %v386, %v530
        %v580 = vsub.f32 %v387, %v531
        %v581 = vsub.f32 %v388, %v531
        %v582 = vsub.f32 %v389, %v532
        %v583 = vsub.f32 %v390, %v532
        %v584 = vsub.f32 %v391, %v533
        %v585 = vsub.f32 %v392, %v533
        %v586 = vsub.f32 %v393, %v534
        %v587 = vsub.f32 %v394, %v534
        %v588 = vsub.f32 %v395, %v535
        %v589 = vsub.f32 %v396, %v535
        %v590 = vsub.f32 %v397, %v536
        %v591 = vsub.f32 %v398, %v536
        %v592 = vsub.f32 %v399, %v537
        %v593 = vsub.f32 %v400, %v537
        %v594 = vsub.f32 %v401, %v538
        %v595 = vsub.f32 %v402, %v538
        %v596 = vsub.f32 %v403, %v539
        %v597 = vsub.f32 %v404, %v539
        %v598 = vsub.f32 %v405, %v540
        %v599 = vsub.f32 %v406, %v540
        %v600 = vsub.f32 %v407, %v541
        %v601 = vsub.f32 %v408, %v541
        %v602 = vsub.f32 %v409, %v542
        %v603 = vsub.f32 %v410, %v542
        %v604 = vsub.f32 %v411, %v543
        %v605 = vsub.f32 %v412, %v543
        %v606 = vsub.f32 %v413, %v544
        %v607 = vsub.f32 %v414, %v544
        %v608 = vsub.f32 %v415, %v545
        %v609 = vsub.f32 %v416, %v545
        %v610 = vmul.f32 %v546, %v546
        %v611 = vmul.f32 %v547, %v547
        %v612 = vmul.f32 %v548, %v548
        %v613 = vmul.f32 %v549, %v549
        %v614 = vmul.f32 %v550, %v550
        %v615 = vmul.f32 %v551, %v551
        %v616 = vmul.f32 %v552, %v552
        %v617 = vmul.f32 %v553, %v553
        %v618 = vmul.f32 %v554, %v554
        %v619 = vmul.f32 %v555, %v555
        %v620 = vmul.f32 %v556, %v556
        %v621 = vmul.f32 %v557, %v557
        %v622 = vmul.f32 %v558, %v558
        %v623 = vmul.f32 %v559, %v559
        %v624 = vmul.f32 %v560, %v560
        %v625 = vmul.f32 %v561, %v561
        %v626 = vmul.f32 %v562, %v562
        %v627 = vmul.f32 %v563, %v563
        %v628 = vmul.f32 %v564, %v564
        %v629 = vmul.f32 %v565, %v565
        %v630 = vmul.f32 %v566, %v566
        %v631 = vmul.f32 %v567, %v567
        %v632 = vmul.f32 %v568, %v568
        %v633 = vmul.f32 %v569, %v569
        %v634 = vmul.f32 %v570, %v570
        %v635 = vmul.f32 %v571, %v571
        %v636 = vmul.f32 %v572, %v572
        %v637 = vmul.f32 %v573, %v573
        %v638 = vmul.f32 %v574, %v574
        %v639 = vmul.f32 %v575, %v575
        %v640 = vmul.f32 %v576, %v576
        %v641 = vmul.f32 %v577, %v577
        %v642 = vmul.f32 %v578, %v578
        %v643 = vmul.f32 %v579, %v579
        %v644 = vmul.f32 %v580, %v580
        %v645 = vmul.f32 %v581, %v581
        %v646 = vmul.f32 %v582, %v582
        %v647 = vmul.f32 %v583, %v583
        %v648 = vmul.f32 %v584, %v584
        %v649 = vmul.f32 %v585, %v585
        %v650 = vmul.f32 %v586, %v586
        %v651 = vmul.f32 %v587, %v587
        %v652 = vmul.f32 %v588, %v588
        %v653 = vmul.f32 %v589, %v589
        %v654 = vmul.f32 %v590, %v590
        %v655 = vmul.f32 %v591, %v591
        %v656 = vmul.f32 %v592, %v592
        %v657 = vmul.f32 %v593, %v593
        %v658 = vmul.f32 %v594, %v594
        %v659 = vmul.f32 %v595, %v595
        %v660 = vmul.f32 %v596, %v596
        %v661 = vmul.f32 %v597, %v597
        %v662 = vmul.f32 %v598, %v598
        %v663 = vmul.f32 %v599, %v599
        %v664 = vmul.f32 %v600, %v600
        %v665 = vmul.f32 %v601, %v601
        %v666 = vmul.f32 %v602, %v602
        %v667 = vmul.f32 %v603, %v603
        %v668 = vmul.f32 %v604, %v604
        %v669 = vmul.f32 %v605, %v605
        %v670 = vmul.f32 %v606, %v606
        %v671 = vmul.f32 %v607, %v607
        %v672 = vmul.f32 %v608, %v608
        %v673 = vmul.f32 %v609, %v609
        %v674 = vadd.f32 %v610, %v611
        %675 = vadd.xlane.f32.xlu0 %v674
        %v676 = vpop.xlane.xlu0 %675
        %v677 = vadd.f32 %v612, %v613
        %678 = vadd.xlane.f32.xlu0 %v677
        %v679 = vpop.xlane.xlu0 %678
        %v680 = vadd.f32 %v614, %v615
        %681 = vadd.xlane.f32.xlu0 %v680
        %v682 = vpop.xlane.xlu0 %681
        %v683 = vadd.f32 %v616, %v617
        %684 = vadd.xlane.f32.xlu0 %v683
        %v685 = vpop.xlane.xlu0 %684
        %v686 = vadd.f32 %v618, %v619
        %687 = vadd.xlane.f32.xlu0 %v686
        %v688 = vpop.xlane.xlu0 %687
        %v689 = vadd.f32 %v620, %v621
        %690 = vadd.xlane.f32.xlu0 %v689
        %v691 = vpop.xlane.xlu0 %690
        %v692 = vadd.f32 %v622, %v623
        %693 = vadd.xlane.f32.xlu0 %v692
        %v694 = vpop.xlane.xlu0 %693
        %v695 = vadd.f32 %v624, %v625
        %696 = vadd.xlane.f32.xlu0 %v695
        %v697 = vpop.xlane.xlu0 %696
        %v698 = vadd.f32 %v626, %v627
        %699 = vadd.xlane.f32.xlu0 %v698
        %v700 = vpop.xlane.xlu0 %699
        %v701 = vadd.f32 %v628, %v629
        %702 = vadd.xlane.f32.xlu0 %v701
        %v703 = vpop.xlane.xlu0 %702
        %v704 = vadd.f32 %v630, %v631
        %705 = vadd.xlane.f32.xlu0 %v704
        %v706 = vpop.xlane.xlu0 %705
        %v707 = vadd.f32 %v632, %v633
        %708 = vadd.xlane.f32.xlu0 %v707
        %v709 = vpop.xlane.xlu0 %708
        %v710 = vadd.f32 %v634, %v635
        %711 = vadd.xlane.f32.xlu0 %v710
        %v712 = vpop.xlane.xlu0 %711
        %v713 = vadd.f32 %v636, %v637
        %714 = vadd.xlane.f32.xlu0 %v713
        %v715 = vpop.xlane.xlu0 %714
        %v716 = vadd.f32 %v638, %v639
        %717 = vadd.xlane.f32.xlu0 %v716
        %v718 = vpop.xlane.xlu0 %717
        %v719 = vadd.f32 %v640, %v641
        %720 = vadd.xlane.f32.xlu0 %v719
        %v721 = vpop.xlane.xlu0 %720
        %v722 = vadd.f32 %v642, %v643
        %723 = vadd.xlane.f32.xlu0 %v722
        %v724 = vpop.xlane.xlu0 %723
        %v725 = vadd.f32 %v644, %v645
        %726 = vadd.xlane.f32.xlu0 %v725
        %v727 = vpop.xlane.xlu0 %726
        %v728 = vadd.f32 %v646, %v647
        %729 = vadd.xlane.f32.xlu0 %v728
        %v730 = vpop.xlane.xlu0 %729
        %v731 = vadd.f32 %v648, %v649
        %732 = vadd.xlane.f32.xlu0 %v731
        %v733 = vpop.xlane.xlu0 %732
        %v734 = vadd.f32 %v650, %v651
        %735 = vadd.xlane.f32.xlu0 %v734
        %v736 = vpop.xlane.xlu0 %735
        %v737 = vadd.f32 %v652, %v653
        %738 = vadd.xlane.f32.xlu0 %v737
        %v739 = vpop.xlane.xlu0 %738
        %v740 = vadd.f32 %v654, %v655
        %741 = vadd.xlane.f32.xlu0 %v740
        %v742 = vpop.xlane.xlu0 %741
        %v743 = vadd.f32 %v656, %v657
        %744 = vadd.xlane.f32.xlu0 %v743
        %v745 = vpop.xlane.xlu0 %744
        %v746 = vadd.f32 %v658, %v659
        %747 = vadd.xlane.f32.xlu0 %v746
        %v748 = vpop.xlane.xlu0 %747
        %v749 = vadd.f32 %v660, %v661
        %750 = vadd.xlane.f32.xlu0 %v749
        %v751 = vpop.xlane.xlu0 %750
        %v752 = vadd.f32 %v662, %v663
        %753 = vadd.xlane.f32.xlu0 %v752
        %v754 = vpop.xlane.xlu0 %753
        %v755 = vadd.f32 %v664, %v665
        %756 = vadd.xlane.f32.xlu0 %v755
        %v757 = vpop.xlane.xlu0 %756
        %v758 = vadd.f32 %v666, %v667
        %759 = vadd.xlane.f32.xlu0 %v758
        %v760 = vpop.xlane.xlu0 %759
        %v761 = vadd.f32 %v668, %v669
        %762 = vadd.xlane.f32.xlu0 %v761
        %v763 = vpop.xlane.xlu0 %762
        %v764 = vadd.f32 %v670, %v671
        %765 = vadd.xlane.f32.xlu0 %v764
        %v766 = vpop.xlane.xlu0 %765
        %v767 = vadd.f32 %v672, %v673
        %768 = vadd.xlane.f32.xlu0 %v767
        %v769 = vpop.xlane.xlu0 %768
        %v770 = vmul.f32 %v676, %v513
        %v771 = vmul.f32 %v679, %v513
        %v772 = vmul.f32 %v682, %v513
        %v773 = vmul.f32 %v685, %v513
        %v774 = vmul.f32 %v688, %v513
        %v775 = vmul.f32 %v691, %v513
        %v776 = vmul.f32 %v694, %v513
        %v777 = vmul.f32 %v697, %v513
        %v778 = vmul.f32 %v700, %v513
        %v779 = vmul.f32 %v703, %v513
        %v780 = vmul.f32 %v706, %v513
        %v781 = vmul.f32 %v709, %v513
        %v782 = vmul.f32 %v712, %v513
        %v783 = vmul.f32 %v715, %v513
        %v784 = vmul.f32 %v718, %v513
        %v785 = vmul.f32 %v721, %v513
        %v786 = vmul.f32 %v724, %v513
        %v787 = vmul.f32 %v727, %v513
        %v788 = vmul.f32 %v730, %v513
        %v789 = vmul.f32 %v733, %v513
        %v790 = vmul.f32 %v736, %v513
        %v791 = vmul.f32 %v739, %v513
        %v792 = vmul.f32 %v742, %v513
        %v793 = vmul.f32 %v745, %v513
        %v794 = vmul.f32 %v748, %v513
        %v795 = vmul.f32 %v751, %v513
        %v796 = vmul.f32 %v754, %v513
        %v797 = vmul.f32 %v757, %v513
        %v798 = vmul.f32 %v760, %v513
        %v799 = vmul.f32 %v763, %v513
        %v800 = vmul.f32 %v766, %v513
        %v801 = vmul.f32 %v769, %v513
        %v802 = vadd.f32 %v770, 1e-06
        %v803 = vadd.f32 %v771, 1e-06
        %v804 = vadd.f32 %v772, 1e-06
        %v805 = vadd.f32 %v773, 1e-06
        %v806 = vadd.f32 %v774, 1e-06
        %v807 = vadd.f32 %v775, 1e-06
        %v808 = vadd.f32 %v776, 1e-06
        %v809 = vadd.f32 %v777, 1e-06
        %v810 = vadd.f32 %v778, 1e-06
        %v811 = vadd.f32 %v779, 1e-06
        %v812 = vadd.f32 %v780, 1e-06
        %v813 = vadd.f32 %v781, 1e-06
        %v814 = vadd.f32 %v782, 1e-06
        %v815 = vadd.f32 %v783, 1e-06
        %v816 = vadd.f32 %v784, 1e-06
        %v817 = vadd.f32 %v785, 1e-06
        %v818 = vadd.f32 %v786, 1e-06
        %v819 = vadd.f32 %v787, 1e-06
        %v820 = vadd.f32 %v788, 1e-06
        %v821 = vadd.f32 %v789, 1e-06
        %v822 = vadd.f32 %v790, 1e-06
        %v823 = vadd.f32 %v791, 1e-06
        %v824 = vadd.f32 %v792, 1e-06
        %v825 = vadd.f32 %v793, 1e-06
        %v826 = vadd.f32 %v794, 1e-06
        %v827 = vadd.f32 %v795, 1e-06
        %v828 = vadd.f32 %v796, 1e-06
        %v829 = vadd.f32 %v797, 1e-06
        %v830 = vadd.f32 %v798, 1e-06
        %v831 = vadd.f32 %v799, 1e-06
        %v832 = vadd.f32 %v800, 1e-06
        %v833 = vadd.f32 %v801, 1e-06
        %v834 = vrsqrt.pop %v802
        %v835 = vrsqrt.pop %v803
        %v836 = vrsqrt.pop %v804
        %v837 = vrsqrt.pop %v805
        %v838 = vrsqrt.pop %v806
        %v839 = vrsqrt.pop %v807
        %v840 = vrsqrt.pop %v808
        %v841 = vrsqrt.pop %v809
        %v842 = vrsqrt.pop %v810
        %v843 = vrsqrt.pop %v811
        %v844 = vrsqrt.pop %v812
        %v845 = vrsqrt.pop %v813
        %v846 = vrsqrt.pop %v814
        %v847 = vrsqrt.pop %v815
        %v848 = vrsqrt.pop %v816
        %v849 = vrsqrt.pop %v817
        %v850 = vrsqrt.pop %v818
        %v851 = vrsqrt.pop %v819
        %v852 = vrsqrt.pop %v820
        %v853 = vrsqrt.pop %v821
        %v854 = vrsqrt.pop %v822
        %v855 = vrsqrt.pop %v823
        %v856 = vrsqrt.pop %v824
        %v857 = vrsqrt.pop %v825
        %v858 = vrsqrt.pop %v826
        %v859 = vrsqrt.pop %v827
        %v860 = vrsqrt.pop %v828
        %v861 = vrsqrt.pop %v829
        %v862 = vrsqrt.pop %v830
        %v863 = vrsqrt.pop %v831
        %v864 = vrsqrt.pop %v832
        %v865 = vrsqrt.pop %v833
        %v866 = vmul.f32 %v546, %v834
        %v867 = vmul.f32 %v547, %v834
        %v868 = vmul.f32 %v548, %v835
        %v869 = vmul.f32 %v549, %v835
        %v870 = vmul.f32 %v550, %v836
        %v871 = vmul.f32 %v551, %v836
        %v872 = vmul.f32 %v552, %v837
        %v873 = vmul.f32 %v553, %v837
        %v874 = vmul.f32 %v554, %v838
        %v875 = vmul.f32 %v555, %v838
        %v876 = vmul.f32 %v556, %v839
        %v877 = vmul.f32 %v557, %v839
        %v878 = vmul.f32 %v558, %v840
        %v879 = vmul.f32 %v559, %v840
        %v880 = vmul.f32 %v560, %v841
        %v881 = vmul.f32 %v561, %v841
        %v882 = vmul.f32 %v562, %v842
        %v883 = vmul.f32 %v563, %v842
        %v884 = vmul.f32 %v564, %v843
        %v885 = vmul.f32 %v565, %v843
        %v886 = vmul.f32 %v566, %v844
        %v887 = vmul.f32 %v567, %v844
        %v888 = vmul.f32 %v568, %v845
        %v889 = vmul.f32 %v569, %v845
        %v890 = vmul.f32 %v570, %v846
        %v891 = vmul.f32 %v571, %v846
        %v892 = vmul.f32 %v572, %v847
        %v893 = vmul.f32 %v573, %v847
        %v894 = vmul.f32 %v574, %v848
        %v895 = vmul.f32 %v575, %v848
        %v896 = vmul.f32 %v576, %v849
        %v897 = vmul.f32 %v577, %v849
        %v898 = vmul.f32 %v578, %v850
        %v899 = vmul.f32 %v579, %v850
        %v900 = vmul.f32 %v580, %v851
        %v901 = vmul.f32 %v581, %v851
        %v902 = vmul.f32 %v582, %v852
        %v903 = vmul.f32 %v583, %v852
        %v904 = vmul.f32 %v584, %v853
        %v905 = vmul.f32 %v585, %v853
        %v906 = vmul.f32 %v586, %v854
        %v907 = vmul.f32 %v587, %v854
        %v908 = vmul.f32 %v588, %v855
        %v909 = vmul.f32 %v589, %v855
        %v910 = vmul.f32 %v590, %v856
        %v911 = vmul.f32 %v591, %v856
        %v912 = vmul.f32 %v592, %v857
        %v913 = vmul.f32 %v593, %v857
        %v914 = vmul.f32 %v594, %v858
        %v915 = vmul.f32 %v595, %v858
        %v916 = vmul.f32 %v596, %v859
        %v917 = vmul.f32 %v597, %v859
        %v918 = vmul.f32 %v598, %v860
        %v919 = vmul.f32 %v599, %v860
        %v920 = vmul.f32 %v600, %v861
        %v921 = vmul.f32 %v601, %v861
        %v922 = vmul.f32 %v602, %v862
        %v923 = vmul.f32 %v603, %v862
        %v924 = vmul.f32 %v604, %v863
        %v925 = vmul.f32 %v605, %v863
        %v926 = vmul.f32 %v606, %v864
        %v927 = vmul.f32 %v607, %v864
        %v928 = vmul.f32 %v608, %v865
        %v929 = vmul.f32 %v609, %v865
        %v930 = vld [vmem:[%s309] sm:$0x3]
        %v931 = vadd.f32 %v930, 1.0
        %v933 = vlaneseq
        %v934 = vshrl.u32 %v933, 7
        %v935 = vsub.s32 0, %v934
        %v936 = vrot.slane %v931, %v935
        %v937 = vlaneseq
        %v938 = vshrl.u32 %v937, 7
        %v939 = vsub.s32 1, %v938
        %v940 = vrot.slane %v931, %v939
        %v943 = vmul.f32 %v866, %v936
        %v944 = vmul.f32 %v867, %v940
        %v945 = vmul.f32 %v868, %v936
        %v946 = vmul.f32 %v869, %v940
        %v947 = vmul.f32 %v870, %v936
        %v948 = vmul.f32 %v871, %v940
        %v949 = vmul.f32 %v872, %v936
        %v950 = vmul.f32 %v873, %v940
        %v951 = vmul.f32 %v874, %v936
        %v952 = vmul.f32 %v875, %v940
        %v953 = vmul.f32 %v876, %v936
        %v954 = vmul.f32 %v877, %v940
        %v955 = vmul.f32 %v878, %v936
        %v956 = vmul.f32 %v879, %v940
        %v957 = vmul.f32 %v880, %v936
        %v958 = vmul.f32 %v881, %v940
        %v959 = vmul.f32 %v882, %v936
        %v960 = vmul.f32 %v883, %v940
        %v961 = vmul.f32 %v884, %v936
        %v962 = vmul.f32 %v885, %v940
        %v963 = vmul.f32 %v886, %v936
        %v964 = vmul.f32 %v887, %v940
        %v965 = vmul.f32 %v888, %v936
        %v966 = vmul.f32 %v889, %v940
        %v967 = vmul.f32 %v890, %v936
        %v968 = vmul.f32 %v891, %v940
        %v969 = vmul.f32 %v892, %v936
        %v970 = vmul.f32 %v893, %v940
        %v971 = vmul.f32 %v894, %v936
        %v972 = vmul.f32 %v895, %v940
        %v973 = vmul.f32 %v896, %v936
        %v974 = vmul.f32 %v897, %v940
        %v975 = vmul.f32 %v898, %v936
        %v976 = vmul.f32 %v899, %v940
        %v977 = vmul.f32 %v900, %v936
        %v978 = vmul.f32 %v901, %v940
        %v979 = vmul.f32 %v902, %v936
        %v980 = vmul.f32 %v903, %v940
        %v981 = vmul.f32 %v904, %v936
        %v982 = vmul.f32 %v905, %v940
        %v983 = vmul.f32 %v906, %v936
        %v984 = vmul.f32 %v907, %v940
        %v985 = vmul.f32 %v908, %v936
        %v986 = vmul.f32 %v909, %v940
        %v987 = vmul.f32 %v910, %v936
        %v988 = vmul.f32 %v911, %v940
        %v989 = vmul.f32 %v912, %v936
        %v990 = vmul.f32 %v913, %v940
        %v991 = vmul.f32 %v914, %v936
        %v992 = vmul.f32 %v915, %v940
        %v993 = vmul.f32 %v916, %v936
        %v994 = vmul.f32 %v917, %v940
        %v995 = vmul.f32 %v918, %v936
        %v996 = vmul.f32 %v919, %v940
        %v997 = vmul.f32 %v920, %v936
        %v998 = vmul.f32 %v921, %v940
        %v999 = vmul.f32 %v922, %v936
        %v1000 = vmul.f32 %v923, %v940
        %v1001 = vmul.f32 %v924, %v936
        %v1002 = vmul.f32 %v925, %v940
        %v1003 = vmul.f32 %v926, %v936
        %v1004 = vmul.f32 %v927, %v940
        %v1005 = vmul.f32 %v928, %v936
        %v1006 = vmul.f32 %v929, %v940
        %v1007 = vld [vmem:[%s300] sm:$0x3]
        %v1009 = vlaneseq
        %v1010 = vshrl.u32 %v1009, 7
        %v1011 = vsub.s32 0, %v1010
        %v1012 = vrot.slane %v1007, %v1011
        %v1013 = vlaneseq
        %v1014 = vshrl.u32 %v1013, 7
        %v1015 = vsub.s32 1, %v1014
        %v1016 = vrot.slane %v1007, %v1015
        %v1019 = vadd.f32 %v943, %v1012
        %v1020 = vadd.f32 %v944, %v1016
        %v1021 = vadd.f32 %v945, %v1012
        %v1022 = vadd.f32 %v946, %v1016
        %v1023 = vadd.f32 %v947, %v1012
        %v1024 = vadd.f32 %v948, %v1016
        %v1025 = vadd.f32 %v949, %v1012
        %v1026 = vadd.f32 %v950, %v1016
        %v1027 = vadd.f32 %v951, %v1012
        %v1028 = vadd.f32 %v952, %v1016
        %v1029 = vadd.f32 %v953, %v1012
        %v1030 = vadd.f32 %v954, %v1016
        %v1031 = vadd.f32 %v955, %v1012
        %v1032 = vadd.f32 %v956, %v1016
        %v1033 = vadd.f32 %v957, %v1012
        %v1034 = vadd.f32 %v958, %v1016
        %v1035 = vadd.f32 %v959, %v1012
        %v1036 = vadd.f32 %v960, %v1016
        %v1037 = vadd.f32 %v961, %v1012
        %v1038 = vadd.f32 %v962, %v1016
        %v1039 = vadd.f32 %v963, %v1012
        %v1040 = vadd.f32 %v964, %v1016
        %v1041 = vadd.f32 %v965, %v1012
        %v1042 = vadd.f32 %v966, %v1016
        %v1043 = vadd.f32 %v967, %v1012
        %v1044 = vadd.f32 %v968, %v1016
        %v1045 = vadd.f32 %v969, %v1012
        %v1046 = vadd.f32 %v970, %v1016
        %v1047 = vadd.f32 %v971, %v1012
        %v1048 = vadd.f32 %v972, %v1016
        %v1049 = vadd.f32 %v973, %v1012
        %v1050 = vadd.f32 %v974, %v1016
        %v1051 = vadd.f32 %v975, %v1012
        %v1052 = vadd.f32 %v976, %v1016
        %v1053 = vadd.f32 %v977, %v1012
        %v1054 = vadd.f32 %v978, %v1016
        %v1055 = vadd.f32 %v979, %v1012
        %v1056 = vadd.f32 %v980, %v1016
        %v1057 = vadd.f32 %v981, %v1012
        %v1058 = vadd.f32 %v982, %v1016
        %v1059 = vadd.f32 %v983, %v1012
        %v1060 = vadd.f32 %v984, %v1016
        %v1061 = vadd.f32 %v985, %v1012
        %v1062 = vadd.f32 %v986, %v1016
        %v1063 = vadd.f32 %v987, %v1012
        %v1064 = vadd.f32 %v988, %v1016
        %v1065 = vadd.f32 %v989, %v1012
        %v1066 = vadd.f32 %v990, %v1016
        %v1067 = vadd.f32 %v991, %v1012
        %v1068 = vadd.f32 %v992, %v1016
        %v1069 = vadd.f32 %v993, %v1012
        %v1070 = vadd.f32 %v994, %v1016
        %v1071 = vadd.f32 %v995, %v1012
        %v1072 = vadd.f32 %v996, %v1016
        %v1073 = vadd.f32 %v997, %v1012
        %v1074 = vadd.f32 %v998, %v1016
        %v1075 = vadd.f32 %v999, %v1012
        %v1076 = vadd.f32 %v1000, %v1016
        %v1077 = vadd.f32 %v1001, %v1012
        %v1078 = vadd.f32 %v1002, %v1016
        %v1079 = vadd.f32 %v1003, %v1012
        %v1080 = vadd.f32 %v1004, %v1016
        %v1081 = vadd.f32 %v1005, %v1012
        %v1082 = vadd.f32 %v1006, %v1016
        %v1083 = vpack.c.bf16 %v1021, %v1019
        %v1084 = vpack.c.bf16 %v1022, %v1020
        %v1085 = vpack.c.bf16 %v1025, %v1023
        %v1086 = vpack.c.bf16 %v1026, %v1024
        %v1087 = vpack.c.bf16 %v1029, %v1027
        %v1088 = vpack.c.bf16 %v1030, %v1028
        %v1089 = vpack.c.bf16 %v1033, %v1031
        %v1090 = vpack.c.bf16 %v1034, %v1032
        %v1091 = vpack.c.bf16 %v1037, %v1035
        %v1092 = vpack.c.bf16 %v1038, %v1036
        %v1093 = vpack.c.bf16 %v1041, %v1039
        %v1094 = vpack.c.bf16 %v1042, %v1040
        %v1095 = vpack.c.bf16 %v1045, %v1043
        %v1096 = vpack.c.bf16 %v1046, %v1044
        %v1097 = vpack.c.bf16 %v1049, %v1047
        %v1098 = vpack.c.bf16 %v1050, %v1048
        %v1099 = vpack.c.bf16 %v1053, %v1051
        %v1100 = vpack.c.bf16 %v1054, %v1052
        %v1101 = vpack.c.bf16 %v1057, %v1055
        %v1102 = vpack.c.bf16 %v1058, %v1056
        %v1103 = vpack.c.bf16 %v1061, %v1059
        %v1104 = vpack.c.bf16 %v1062, %v1060
        %v1105 = vpack.c.bf16 %v1065, %v1063
        %v1106 = vpack.c.bf16 %v1066, %v1064
        %v1107 = vpack.c.bf16 %v1069, %v1067
        %v1108 = vpack.c.bf16 %v1070, %v1068
        %v1109 = vpack.c.bf16 %v1073, %v1071
        %v1110 = vpack.c.bf16 %v1074, %v1072
        %v1111 = vpack.c.bf16 %v1077, %v1075
        %v1112 = vpack.c.bf16 %v1078, %v1076
        %v1113 = vpack.c.bf16 %v1081, %v1079
        %v1114 = vpack.c.bf16 %v1082, %v1080
        %v1115 = vld [vmem:[#allocation8] sm:$0xf]
        %v1116 = vld [vmem:[#allocation8 + $0x4] sm:$0xf]
        %v1117 = vld [vmem:[#allocation8 + $0x8] sm:$0xf]
        %v1118 = vld [vmem:[#allocation8 + $0xc] sm:$0xf]
        %v1119 = vld [vmem:[#allocation8 + $0x10] sm:$0xf]
        %v1120 = vld [vmem:[#allocation8 + $0x14] sm:$0xf]
        %v1121 = vld [vmem:[#allocation8 + $0x18] sm:$0xf]
        %v1122 = vld [vmem:[#allocation8 + $0x1c] sm:$0xf]
        %v1123 = vld [vmem:[#allocation8 + $0x20] sm:$0xf]
        %v1124 = vld [vmem:[#allocation8 + $0x24] sm:$0xf]
        %v1125 = vld [vmem:[#allocation8 + $0x28] sm:$0xf]
        %v1126 = vld [vmem:[#allocation8 + $0x2c] sm:$0xf]
        %v1127 = vld [vmem:[#allocation8 + $0x30] sm:$0xf]
        %v1128 = vld [vmem:[#allocation8 + $0x34] sm:$0xf]
        %v1129 = vld [vmem:[#allocation8 + $0x38] sm:$0xf]
        %v1130 = vld [vmem:[#allocation8 + $0x3c] sm:$0xf]
        %v1131 = vld [vmem:[#allocation8 + $0x40] sm:$0xf]
        %v1132 = vld [vmem:[#allocation8 + $0x44] sm:$0xf]
        %v1133 = vld [vmem:[#allocation8 + $0x48] sm:$0xf]
        %v1134 = vld [vmem:[#allocation8 + $0x4c] sm:$0xf]
        %v1135 = vld [vmem:[#allocation8 + $0x50] sm:$0xf]
        %v1136 = vld [vmem:[#allocation8 + $0x54] sm:$0xf]
        %v1137 = vld [vmem:[#allocation8 + $0x58] sm:$0xf]
        %v1138 = vld [vmem:[#allocation8 + $0x5c] sm:$0xf]
        %v1139 = vld [vmem:[#allocation8 + $0x60] sm:$0xf]
        %v1140 = vld [vmem:[#allocation8 + $0x64] sm:$0xf]
        %v1141 = vld [vmem:[#allocation8 + $0x68] sm:$0xf]
        %v1142 = vld [vmem:[#allocation8 + $0x6c] sm:$0xf]
        %v1143 = vld [vmem:[#allocation8 + $0x70] sm:$0xf]
        %v1144 = vld [vmem:[#allocation8 + $0x74] sm:$0xf]
        %v1145 = vld [vmem:[#allocation8 + $0x78] sm:$0xf]
        %v1146 = vld [vmem:[#allocation8 + $0x7c] sm:$0xf]
        %v1147 = vld [vmem:[%s4] sm:$0x1]
        %v1149 = vlaneseq
        %v1150 = vshrl.u32 %v1149, 7
        %v1151 = vsub.s32 0, %v1150
        %v1152 = vrot.slane %v1147, %v1151
        %v1186 = vunpack.c.l.b16 %v1115
        %v1187 = vunpack.c.l.b16 %v1116
        %v1188 = vunpack.c.l.b16 %v1117
        %v1189 = vunpack.c.l.b16 %v1118
        %v1190 = vunpack.c.l.b16 %v1119
        %v1191 = vunpack.c.l.b16 %v1120
        %v1192 = vunpack.c.l.b16 %v1121
        %v1193 = vunpack.c.l.b16 %v1122
        %v1194 = vunpack.c.l.b16 %v1123
        %v1195 = vunpack.c.l.b16 %v1124
        %v1196 = vunpack.c.l.b16 %v1125
        %v1197 = vunpack.c.l.b16 %v1126
        %v1198 = vunpack.c.l.b16 %v1127
        %v1199 = vunpack.c.l.b16 %v1128
        %v1200 = vunpack.c.l.b16 %v1129
        %v1201 = vunpack.c.l.b16 %v1130
        %v1202 = vunpack.c.l.b16 %v1131
        %v1203 = vunpack.c.l.b16 %v1132
        %v1204 = vunpack.c.l.b16 %v1133
        %v1205 = vunpack.c.l.b16 %v1134
        %v1206 = vunpack.c.l.b16 %v1135
        %v1207 = vunpack.c.l.b16 %v1136
        %v1208 = vunpack.c.l.b16 %v1137
        %v1209 = vunpack.c.l.b16 %v1138
        %v1210 = vunpack.c.l.b16 %v1139
        %v1211 = vunpack.c.l.b16 %v1140
        %v1212 = vunpack.c.l.b16 %v1141
        %v1213 = vunpack.c.l.b16 %v1142
        %v1214 = vunpack.c.l.b16 %v1143
        %v1215 = vunpack.c.l.b16 %v1144
        %v1216 = vunpack.c.l.b16 %v1145
        %v1217 = vunpack.c.l.b16 %v1146
        %v1218 = vpack.c.b16 %v1187, %v1186
        %v1219 = vpack.c.b16 %v1189, %v1188
        %v1220 = vpack.c.b16 %v1191, %v1190
        %v1221 = vpack.c.b16 %v1193, %v1192
        %v1222 = vpack.c.b16 %v1195, %v1194
        %v1223 = vpack.c.b16 %v1197, %v1196
        %v1224 = vpack.c.b16 %v1199, %v1198
        %v1225 = vpack.c.b16 %v1201, %v1200
        %v1226 = vpack.c.b16 %v1203, %v1202
        %v1227 = vpack.c.b16 %v1205, %v1204
        %v1228 = vpack.c.b16 %v1207, %v1206
        %v1229 = vpack.c.b16 %v1209, %v1208
        %v1230 = vpack.c.b16 %v1211, %v1210
        %v1231 = vpack.c.b16 %v1213, %v1212
        %v1232 = vpack.c.b16 %v1215, %v1214
        %v1233 = vpack.c.b16 %v1217, %v1216
        %1250 = vmatprep.subr.bf16.mxu0 0
        %1251 = vmatpush1.bf16.msra.mxu0 %v1225
        %1252 = vmatprep.subr.bf16.mxu0 0
        %1253 = vmatpush1.bf16.msra.mxu0 %v1224
        %1254 = vmatprep.subr.bf16.mxu0 0
        %1255 = vmatpush1.bf16.msra.mxu0 %v1223
        %1256 = vmatprep.subr.bf16.mxu0 0
        %1257 = vmatpush1.bf16.msra.mxu0 %v1222
        %1258 = vmatprep.subr.bf16.mxu0 0
        %1259 = vmatpush1.bf16.msra.mxu0 %v1221
        %1260 = vmatprep.subr.bf16.mxu0 0
        %1261 = vmatpush1.bf16.msra.mxu0 %v1220
        %1262 = vmatprep.subr.bf16.mxu0 0
        %1263 = vmatpush1.bf16.msra.mxu0 %v1219
        %1264 = vmatprep.subr.bf16.mxu0 0
        %1265 = vmatpush1.bf16.msra.mxu0 %v1218
        %1266 = vmatprep.subr.bf16.mxu0 0
        %1267 = vmatpush2.bf16.msra.mxu0 %v1233
        %1268 = vmatprep.subr.bf16.mxu0 0
        %1269 = vmatpush2.bf16.msra.mxu0 %v1232
        %1270 = vmatprep.subr.bf16.mxu0 0
        %1271 = vmatpush2.bf16.msra.mxu0 %v1231
        %1272 = vmatprep.subr.bf16.mxu0 0
        %1273 = vmatpush2.bf16.msra.mxu0 %v1230
        %1274 = vmatprep.subr.bf16.mxu0 0
        %1275 = vmatpush2.bf16.msra.mxu0 %v1229
        %1276 = vmatprep.subr.bf16.mxu0 0
        %1277 = vmatpush2.bf16.msra.mxu0 %v1228
        %1278 = vmatprep.subr.bf16.mxu0 0
        %1279 = vmatpush2.bf16.msra.mxu0 %v1227
        %1280 = vmatprep.subr.bf16.mxu0 0
        %1281 = vmatpush2.bf16.msra.mxu0 %v1226
        %1282 = vmatprep.mubr.bf16.mxu0 %v1084
        %1283 = vmatmul.mubr.bf16.gmra.mxu0 %v1083
        %v1284 = vpop.f32.mrf.mxu0
        %v1285 = vadd.f32 %v1152, %v1284
        %v1286 = vpop.f32.mrf.mxu0
        %v1287 = vpop.f32.mrf.mxu0
        %v1288 = vadd.f32 %v1152, %v1287
        %v1289 = vpop.f32.mrf.mxu0
        %1290 = vmatprep.mubr.bf16.mxu0 %v1086
        %1291 = vmatmul.mubr.bf16.gmra.mxu0 %v1085
        %v1292 = vpop.f32.mrf.mxu0
        %v1293 = vadd.f32 %v1152, %v1292
        %v1294 = vpop.f32.mrf.mxu0
        %v1295 = vpop.f32.mrf.mxu0
        %v1296 = vadd.f32 %v1152, %v1295
        %v1297 = vpop.f32.mrf.mxu0
        %1298 = vmatprep.mubr.bf16.mxu0 %v1088
        %1299 = vmatmul.mubr.bf16.gmra.mxu0 %v1087
        %v1300 = vpop.f32.mrf.mxu0
        %v1301 = vadd.f32 %v1152, %v1300
        %v1302 = vpop.f32.mrf.mxu0
        %v1303 = vpop.f32.mrf.mxu0
        %v1304 = vadd.f32 %v1152, %v1303
        %v1305 = vpop.f32.mrf.mxu0
        %1306 = vmatprep.mubr.bf16.mxu0 %v1090
        %1307 = vmatmul.mubr.bf16.gmra.mxu0 %v1089
        %v1308 = vpop.f32.mrf.mxu0
        %v1309 = vadd.f32 %v1152, %v1308
        %v1310 = vpop.f32.mrf.mxu0
        %v1311 = vpop.f32.mrf.mxu0
        %v1312 = vadd.f32 %v1152, %v1311
        %v1313 = vpop.f32.mrf.mxu0
        %1314 = vmatprep.mubr.bf16.mxu0 %v1092
        %1315 = vmatmul.mubr.bf16.gmra.mxu0 %v1091
        %v1316 = vpop.f32.mrf.mxu0
        %v1317 = vadd.f32 %v1152, %v1316
        %v1318 = vpop.f32.mrf.mxu0
        %v1319 = vpop.f32.mrf.mxu0
        %v1320 = vadd.f32 %v1152, %v1319
        %v1321 = vpop.f32.mrf.mxu0
        %1322 = vmatprep.mubr.bf16.mxu0 %v1094
        %1323 = vmatmul.mubr.bf16.gmra.mxu0 %v1093
        %v1324 = vpop.f32.mrf.mxu0
        %v1325 = vadd.f32 %v1152, %v1324
        %v1326 = vpop.f32.mrf.mxu0
        %v1327 = vpop.f32.mrf.mxu0
        %v1328 = vadd.f32 %v1152, %v1327
        %v1329 = vpop.f32.mrf.mxu0
        %1330 = vmatprep.mubr.bf16.mxu0 %v1096
        %1331 = vmatmul.mubr.bf16.gmra.mxu0 %v1095
        %v1332 = vpop.f32.mrf.mxu0
        %v1333 = vadd.f32 %v1152, %v1332
        %v1334 = vpop.f32.mrf.mxu0
        %v1335 = vpop.f32.mrf.mxu0
        %v1336 = vadd.f32 %v1152, %v1335
        %v1337 = vpop.f32.mrf.mxu0
        %1338 = vmatprep.mubr.bf16.mxu0 %v1098
        %1339 = vmatmul.mubr.bf16.gmra.mxu0 %v1097
        %v1340 = vpop.f32.mrf.mxu0
        %v1341 = vadd.f32 %v1152, %v1340
        %v1342 = vpop.f32.mrf.mxu0
        %v1343 = vpop.f32.mrf.mxu0
        %v1344 = vadd.f32 %v1152, %v1343
        %v1345 = vpop.f32.mrf.mxu0
        %1346 = vmatprep.mubr.bf16.mxu0 %v1100
        %1347 = vmatmul.mubr.bf16.gmra.mxu0 %v1099
        %v1348 = vpop.f32.mrf.mxu0
        %v1349 = vadd.f32 %v1152, %v1348
        %v1350 = vpop.f32.mrf.mxu0
        %v1351 = vpop.f32.mrf.mxu0
        %v1352 = vadd.f32 %v1152, %v1351
        %v1353 = vpop.f32.mrf.mxu0
        %1354 = vmatprep.mubr.bf16.mxu0 %v1102
        %1355 = vmatmul.mubr.bf16.gmra.mxu0 %v1101
        %v1356 = vpop.f32.mrf.mxu0
        %v1357 = vadd.f32 %v1152, %v1356
        %v1358 = vpop.f32.mrf.mxu0
        %v1359 = vpop.f32.mrf.mxu0
        %v1360 = vadd.f32 %v1152, %v1359
        %v1361 = vpop.f32.mrf.mxu0
        %1362 = vmatprep.mubr.bf16.mxu0 %v1104
        %1363 = vmatmul.mubr.bf16.gmra.mxu0 %v1103
        %v1364 = vpop.f32.mrf.mxu0
        %v1365 = vadd.f32 %v1152, %v1364
        %v1366 = vpop.f32.mrf.mxu0
        %v1367 = vpop.f32.mrf.mxu0
        %v1368 = vadd.f32 %v1152, %v1367
        %v1369 = vpop.f32.mrf.mxu0
        %1370 = vmatprep.mubr.bf16.mxu0 %v1106
        %1371 = vmatmul.mubr.bf16.gmra.mxu0 %v1105
        %v1372 = vpop.f32.mrf.mxu0
        %v1373 = vadd.f32 %v1152, %v1372
        %v1374 = vpop.f32.mrf.mxu0
        %v1375 = vpop.f32.mrf.mxu0
        %v1376 = vadd.f32 %v1152, %v1375
        %v1377 = vpop.f32.mrf.mxu0
        %1378 = vmatprep.mubr.bf16.mxu0 %v1108
        %1379 = vmatmul.mubr.bf16.gmra.mxu0 %v1107
        %v1380 = vpop.f32.mrf.mxu0
        %v1381 = vadd.f32 %v1152, %v1380
        %v1382 = vpop.f32.mrf.mxu0
        %v1383 = vpop.f32.mrf.mxu0
        %v1384 = vadd.f32 %v1152, %v1383
        %v1385 = vpop.f32.mrf.mxu0
        %1386 = vmatprep.mubr.bf16.mxu0 %v1110
        %1387 = vmatmul.mubr.bf16.gmra.mxu0 %v1109
        %v1388 = vpop.f32.mrf.mxu0
        %v1389 = vadd.f32 %v1152, %v1388
        %v1390 = vpop.f32.mrf.mxu0
        %v1391 = vpop.f32.mrf.mxu0
        %v1392 = vadd.f32 %v1152, %v1391
        %v1393 = vpop.f32.mrf.mxu0
        %1394 = vmatprep.mubr.bf16.mxu0 %v1112
        %1395 = vmatmul.mubr.bf16.gmra.mxu0 %v1111
        %v1396 = vpop.f32.mrf.mxu0
        %v1397 = vadd.f32 %v1152, %v1396
        %v1398 = vpop.f32.mrf.mxu0
        %v1399 = vpop.f32.mrf.mxu0
        %v1400 = vadd.f32 %v1152, %v1399
        %v1401 = vpop.f32.mrf.mxu0
        %1402 = vmatprep.mubr.bf16.mxu0 %v1114
        %1403 = vmatmul.mubr.bf16.gmra.mxu0 %v1113
        %v1404 = vpop.f32.mrf.mxu0
        %v1405 = vadd.f32 %v1152, %v1404
        %v1406 = vpop.f32.mrf.mxu0
        %v1407 = vpop.f32.mrf.mxu0
        %v1408 = vadd.f32 %v1152, %v1407
        %v1409 = vpop.f32.mrf.mxu0
        %1410 = vdwg.mxu0
        %1411 = vst [vmem:[%s349] sm:$0xff] %v1285
        %1412 = vst [vmem:[%s349 + $0x8] sm:$0xff] %v1288
        %1413 = vst [vmem:[%s349 + $0x10] sm:$0xff] %v1293
        %1414 = vst [vmem:[%s349 + $0x18] sm:$0xff] %v1296
        %1415 = vst [vmem:[%s349 + $0x20] sm:$0xff] %v1301
        %1416 = vst [vmem:[%s349 + $0x28] sm:$0xff] %v1304
        %1417 = vst [vmem:[%s349 + $0x30] sm:$0xff] %v1309
        %1418 = vst [vmem:[%s349 + $0x38] sm:$0xff] %v1312
        %1419 = vst [vmem:[%s349 + $0x40] sm:$0xff] %v1317
        %1420 = vst [vmem:[%s349 + $0x48] sm:$0xff] %v1320
        %1421 = vst [vmem:[%s349 + $0x50] sm:$0xff] %v1325
        %1422 = vst [vmem:[%s349 + $0x58] sm:$0xff] %v1328
        %1423 = vst [vmem:[%s349 + $0x60] sm:$0xff] %v1333
        %1424 = vst [vmem:[%s349 + $0x68] sm:$0xff] %v1336
        %1425 = vst [vmem:[%s349 + $0x70] sm:$0xff] %v1341
        %1426 = vst [vmem:[%s349 + $0x78] sm:$0xff] %v1344
        %1427 = vst [vmem:[%s349 + $0x80] sm:$0xff] %v1349
        %1428 = vst [vmem:[%s349 + $0x88] sm:$0xff] %v1352
        %1429 = vst [vmem:[%s349 + $0x90] sm:$0xff] %v1357
        %1430 = vst [vmem:[%s349 + $0x98] sm:$0xff] %v1360
        %1431 = vst [vmem:[%s349 + $0xa0] sm:$0xff] %v1365
        %1432 = vst [vmem:[%s349 + $0xa8] sm:$0xff] %v1368
        %1433 = vst [vmem:[%s349 + $0xb0] sm:$0xff] %v1373
        %1434 = vst [vmem:[%s349 + $0xb8] sm:$0xff] %v1376
        %1435 = vst [vmem:[%s349 + $0xc0] sm:$0xff] %v1381
        %1436 = vst [vmem:[%s349 + $0xc8] sm:$0xff] %v1384
        %1437 = vst [vmem:[%s349 + $0xd0] sm:$0xff] %v1389
        %1438 = vst [vmem:[%s349 + $0xd8] sm:$0xff] %v1392
        %1439 = vst [vmem:[%s349 + $0xe0] sm:$0xff] %v1397
        %1440 = vst [vmem:[%s349 + $0xe8] sm:$0xff] %v1400
        %1441 = vst [vmem:[%s349 + $0xf0] sm:$0xff] %v1405
        %1442 = vst [vmem:[%s349 + $0xf8] sm:$0xff] %v1408
        %s1443 = sand.u32 %s170, 1
        %s1444 = scalar_lea.sflag [#allocation4], %s1443
        %s1445 = sand.u32 %s170, 1
        %s1446 = smul.addr %s1445, 256
        %s1447 = scalar_lea.vmem [#allocation10], %s1446
        // Predicated region
        $region57: #{tpu_custom_call.1} parent=39 // pred_check
          %p1448 = pneg %p180
        $region58: #{tpu_custom_call.1} parent=39 // pred_check_branch
          %1450 = sbr.rel (%p1448) target = $region60
        $region59: #{tpu_custom_call.1} parent=39 // pred_region
          %s1451 = smul.u32 32, %s31
          %s1453 = ssub.s32 4096, 4096
          %1454 = vsyncadd %s1444, %s1453
          %s1455 = smul.addr %s30, 32
          %s1456 = sadd.s32 %s1451, %s1455
          %s1457 = smul.addr %s1456, 128
          %s1458 = scalar_lea.hbm %s5, %s1457
          %s1459 = sshll.u32 %s1447, 4
          %s1460 = int_to_ptr.vmem [resolvable:$true] %s1459
          %1465 = dma.vmem_to_hbm [thread:$0]  %s1460, 4096, %s1458, %s1444, 128, 128, 8
        $region60: #{tpu_custom_call.1} parent=39 // pred_fallthru
          _
      $region40: #{tpu_custom_call.1} parent=5 // pred_fallthru
        _
      %p1466 = scmp.le.s32.totalorder 2, %s21
      // Predicated region
      $region61: #{tpu_custom_call.1} parent=5 // pred_check
        %p1467 = pneg %p1466
      $region62: #{tpu_custom_call.1} parent=5 // pred_check_branch
        %1469 = sbr.rel (%p1467) target = $region64
      $region63: #{tpu_custom_call.1} parent=5 // pred_region
        %s1470 = ssub.s32 %s21, 2
        // Predicated region
        $region65: #{tpu_custom_call.1} parent=63 // pred_check
          %p1471 = pneg %p186
        $region66: #{tpu_custom_call.1} parent=63 // pred_check_branch
          %1473 = sbr.rel (%p1471) target = $region68
        $region67: #{tpu_custom_call.1} parent=63 // pred_region
          %s1474 = sand.u32 %s171, 1
          %s1475 = scalar_lea.sflag [#allocation4], %s1474
          %s1476 = sand.u32 %s171, 1
          %s1477 = smul.addr %s1476, 256
          %s1478 = scalar_lea.vmem [#allocation10], %s1477
          %1479 = dma.done %s1475, 4096
        $region68: #{tpu_custom_call.1} parent=63 // pred_fallthru
          _
      $region64: #{tpu_custom_call.1} parent=5 // pred_fallthru
        _
    $region6: #{tpu_custom_call.1} parent=1 // loop_footer
      %s25 = sadd.s32 1, %s21
    $region7: #{tpu_custom_call.1} parent=1 // loop_footer_branch
      %20 = sbr.rel target = $region3
    $region8: #{tpu_custom_call.1} parent=1 // loop_exit
      _
    %1480 = vsyncpa [#allocation3], 1
    %s1481 = scalar_lea.sflag [#allocation3], 1
    %1482 = vsyncpa %s1481, 1
    %1483 = vsyncpa [#allocation6], 1
    %s1484 = scalar_lea.sflag [#allocation6], 1
    %1485 = vsyncpa %s1484, 1
    %1486 = vsyncpa [#allocation9], 1
    %1487 = vsyncpa [#allocation4], 1
    %s1488 = scalar_lea.sflag [#allocation4], 1
    %1489 = vsyncpa %s1488, 1

// kernel: tpu_custom_call.1
$region0: #{tpu_custom_call.1}
  #allocation0 [shape = 'u32[]', space=smem, size = 0x4, offset = 0x4, fixed_abs, tag = 'smem constant byte address 0x4 - core index']
  #allocation1 [shape = 'u32[144,128]{1,0:T(1,128)}', space=vmem, size = 0x12000, scoped, tag = 'internal scratch']
  %s0 = inlined_call_operand.hbm [shape: f32[2,256,256], index: 0, kind: input, shape index: {}]
  %s1 = inlined_call_operand.hbm [shape: f32[2,1,256], index: 1, kind: input, shape index: {}]
  %s2 = inlined_call_operand.hbm [shape: f32[2,1,256], index: 2, kind: input, shape index: {}]
  %s3 = inlined_call_operand.hbm [shape: bf16[256,128], index: 3, kind: input, shape index: {}]
  %s4 = inlined_call_operand.vmem [shape: f32[1,128], index: 4, kind: input, shape index: {}]
  %s5 = inlined_call_operand.hbm [shape: f32[2,256,128], index: 5, kind: output, shape index: {}]
  %s6 = sld [smem:[#allocation0]]
  $region69: #{tpu_custom_call.1} parent=0
    _
  %s8 = ssub.s32 1, %s6
  %s9 = scalar_select 0, %s8, %s6
  $region1: #{tpu_custom_call.1} parent=0
    #allocation2 [shape = 'u8[524288]{0}', space=vmem, size = 0x80000, scoped, tag = 'input window, operand 0']
    #allocation3 [shape = 's32[2]{0}', space=sflag, size = 0x8, scoped, tag = 'scoped memory for tpu_custom_call.1']
    #allocation4 [shape = 's32[2]{0}', space=sflag, size = 0x8, scoped, tag = 'scoped memory for tpu_custom_call.1']
    #allocation5 [shape = 'u8[2048]{0}', space=vmem, size = 0x800, scoped, tag = 'input window, operand 1']
    #allocation6 [shape = 's32[2]{0}', space=sflag, size = 0x8, scoped, tag = 'scoped memory for tpu_custom_call.1']
    #allocation7 [shape = 'u8[2048]{0}', space=vmem, size = 0x800, scoped, tag = 'input window, operand 2']
    #allocation8 [shape = 'u8[65536]{0}', space=vmem, size = 0x10000, scoped, tag = 'input window, operand 3, single buffered']
    #allocation9 [shape = 's32[1]{0}', space=sflag, size = 0x4, scoped, tag = 'scoped memory for tpu_custom_call.1']
    #allocation10 [shape = 'u8[262144]{0}', space=vmem, size = 0x40000, scoped, tag = 'output window, operand 0']
    %10 = vsyncpa [#allocation3], 0
    %s11 = scalar_lea.sflag [#allocation3], 1
    %12 = vsyncpa %s11, 0
    %13 = vsyncpa [#allocation6], 0
    %s14 = scalar_lea.sflag [#allocation6], 1
    %15 = vsyncpa %s14, 0
    %16 = vsyncpa [#allocation9], 0
    %17 = vsyncpa [#allocation4], 0
    %s18 = scalar_lea.sflag [#allocation4], 1
    %19 = vsyncpa %s18, 0
    loop: start=0, step=1, limit=4
    $region2: #{tpu_custom_call.1} parent=1 // loop_pre_header
      _
    $region3: #{tpu_custom_call.1} parent=1 // loop_header
      %s21 = sphi 0, %s25
      %p22 = scmp.ge.s32.totalorder %s21, 4
      %s28 = sphi 0, %s40
      %s29 = sphi 0, %s36
      %s30 = sphi 0, %s28
      %s31 = sphi 0, %s29
      %s32 = sphi 0, %s30
      %s33 = sphi 0, %s31
      %s45 = sphi 0, %s47
      %s48 = sphi 0, %s45
      %s49 = sphi 0, %s48
      %s65 = sphi 0, %s49
      %s71 = sphi 0, %s73
      %s74 = sphi 0, %s71
      %s75 = sphi 0, %s74
      %s91 = sphi 0, %s75
      %s97 = sphi 0, %s99
      %s100 = sphi 0, %s97
      %s101 = sphi 0, %s100
      %s117 = sphi 0, %s101
      %s121 = sphi 0, %s121
      %s123 = sphi 0, %s121
      %s124 = sphi 0, %s123
      %s138 = sphi 0, %s124
      %s142 = sphi 0, %s142
      %s144 = sphi 0, %s142
      %s145 = sphi 0, %s144
      %s159 = sphi 0, %s145
      %s167 = sphi 0, %s169
      %s170 = sphi 0, %s167
      %s171 = sphi 0, %s170
      %s187 = sphi 0, %s171
    $region4: #{tpu_custom_call.1} parent=1 // loop_header_branch
      %24 = sbr.rel (%p22) target = $region8
    $region5: #{tpu_custom_call.1} parent=1 // loop_body
      %s26 = ssub.s32 %s21, 1
      %s27 = ssub.s32 %s21, 2
      %s34 = sadd.s32 1, %s29
      %p35 = scmp.ge.s32.totalorder %s34, 1
      %s36 = scalar_select %p35, 0, %s34
      %s37 = sadd.s32 1, %s28
      %s38 = scalar_select %p35, %s37, %s28
      %p39 = scmp.ge.s32.totalorder %s38, 2
      %s40 = scalar_select %p39, 0, %s38
      %s41 = ssub.s32 %s28, %s40
      %s42 = ssub.s32 %s29, %s36
      %s43 = sor.u32 %s41, %s42
      %p44 = scmp.eq.s32.totalorder %s43, 0
      %s46 = sadd.s32 %s45, 1
      %s47 = scalar_select %p44, %s45, %s46
      %p50 = pneg %p44
      %p51 = scmp.eq.s32.totalorder %s21, 1
      %p52 = por %p50, %p51
      %p53 = scmp.ne.s32.totalorder %s45, %s48
      %p54 = scmp.eq.s32.totalorder %s21, 0
      %p55 = por %p53, %p54
      %p56 = scmp.ne.s32.totalorder %s45, %s48
      %p57 = scmp.eq.s32.totalorder %s26, 1
      %p58 = por %p56, %p57
      %p59 = scmp.ne.s32.totalorder %s48, %s49
      %p60 = scmp.eq.s32.totalorder %s26, 0
      %p61 = por %p59, %p60
      %p62 = scmp.ne.s32.totalorder %s48, %s49
      %p63 = scmp.eq.s32.totalorder %s27, 1
      %p64 = por %p62, %p63
      %p66 = scmp.ne.s32.totalorder %s49, %s65
      %p67 = scmp.eq.s32.totalorder %s27, 0
      %p68 = por %p66, %p67
      %s69 = ssub.s32 %s28, %s40
      %p70 = scmp.eq.s32.totalorder %s69, 0
      %s72 = sadd.s32 %s71, 1
      %s73 = scalar_select %p70, %s71, %s72
      %p76 = pneg %p70
      %p77 = scmp.eq.s32.totalorder %s21, 1
      %p78 = por %p76, %p77
      %p79 = scmp.ne.s32.totalorder %s71, %s74
      %p80 = scmp.eq.s32.totalorder %s21, 0
      %p81 = por %p79, %p80
      %p82 = scmp.ne.s32.totalorder %s71, %s74
      %p83 = scmp.eq.s32.totalorder %s26, 1
      %p84 = por %p82, %p83
      %p85 = scmp.ne.s32.totalorder %s74, %s75
      %p86 = scmp.eq.s32.totalorder %s26, 0
      %p87 = por %p85, %p86
      %p88 = scmp.ne.s32.totalorder %s74, %s75
      %p89 = scmp.eq.s32.totalorder %s27, 1
      %p90 = por %p88, %p89
      %p92 = scmp.ne.s32.totalorder %s75, %s91
      %p93 = scmp.eq.s32.totalorder %s27, 0
      %p94 = por %p92, %p93
      %s95 = ssub.s32 %s28, %s40
      %p96 = scmp.eq.s32.totalorder %s95, 0
      %s98 = sadd.s32 %s97, 1
      %s99 = scalar_select %p96, %s97, %s98
      %p102 = pneg %p96
      %p103 = scmp.eq.s32.totalorder %s21, 1
      %p104 = por %p102, %p103
      %p105 = scmp.ne.s32.totalorder %s97, %s100
      %p106 = scmp.eq.s32.totalorder %s21, 0
      %p107 = por %p105, %p106
      %p108 = scmp.ne.s32.totalorder %s97, %s100
      %p109 = scmp.eq.s32.totalorder %s26, 1
      %p110 = por %p108, %p109
      %p111 = scmp.ne.s32.totalorder %s100, %s101
      %p112 = scmp.eq.s32.totalorder %s26, 0
      %p113 = por %p111, %p112
      %p114 = scmp.ne.s32.totalorder %s100, %s101
      %p115 = scmp.eq.s32.totalorder %s27, 1
      %p116 = por %p114, %p115
      %p118 = scmp.ne.s32.totalorder %s101, %s117
      %p119 = scmp.eq.s32.totalorder %s27, 0
      %p120 = por %p118, %p119
      %s122 = sadd.s32 %s121, 1
      %p125 = scmp.eq.s32.totalorder %s21, 1
      %p126 = scmp.ne.s32.totalorder %s121, %s123
      %p127 = scmp.eq.s32.totalorder %s21, 0
      %p128 = por %p126, %p127
      %p129 = scmp.ne.s32.totalorder %s121, %s123
      %p130 = scmp.eq.s32.totalorder %s26, 1
      %p131 = por %p129, %p130
      %p132 = scmp.ne.s32.totalorder %s123, %s124
      %p133 = scmp.eq.s32.totalorder %s26, 0
      %p134 = por %p132, %p133
      %p135 = scmp.ne.s32.totalorder %s123, %s124
      %p136 = scmp.eq.s32.totalorder %s27, 1
      %p137 = por %p135, %p136
      %p139 = scmp.ne.s32.totalorder %s124, %s138
      %p140 = scmp.eq.s32.totalorder %s27, 0
      %p141 = por %p139, %p140
      %s143 = sadd.s32 %s142, 1
      %p146 = scmp.eq.s32.totalorder %s21, 1
      %p147 = scmp.ne.s32.totalorder %s142, %s144
      %p148 = scmp.eq.s32.totalorder %s21, 0
      %p149 = por %p147, %p148
      %p150 = scmp.ne.s32.totalorder %s142, %s144
      %p151 = scmp.eq.s32.totalorder %s26, 1
      %p152 = por %p150, %p151
      %p153 = scmp.ne.s32.totalorder %s144, %s145
      %p154 = scmp.eq.s32.totalorder %s26, 0
      %p155 = por %p153, %p154
      %p156 = scmp.ne.s32.totalorder %s144, %s145
      %p157 = scmp.eq.s32.totalorder %s27, 1
      %p158 = por %p156, %p157
      %p160 = scmp.ne.s32.totalorder %s145, %s159
      %p161 = scmp.eq.s32.totalorder %s27, 0
      %p162 = por %p160, %p161
      %s163 = ssub.s32 %s28, %s40
      %s164 = ssub.s32 %s29, %s36
      %s165 = sor.u32 %s163, %s164
      %p166 = scmp.eq.s32.totalorder %s165, 0
      %s168 = sadd.s32 %s167, 1
      %s169 = scalar_select %p166, %s167, %s168
      %p172 = pneg %p166
      %p173 = scmp.eq.s32.totalorder %s21, 1
      %p174 = por %p172, %p173
      %p175 = scmp.ne.s32.totalorder %s167, %s170
      %p176 = scmp.eq.s32.totalorder %s21, 0
      %p177 = por %p175, %p176
      %p178 = scmp.ne.s32.totalorder %s167, %s170
      %p179 = scmp.eq.s32.totalorder %s26, 1
      %p180 = por %p178, %p179
      %p181 = scmp.ne.s32.totalorder %s170, %s171
      %p182 = scmp.eq.s32.totalorder %s26, 0
      %p183 = por %p181, %p182
      %p184 = scmp.ne.s32.totalorder %s170, %s171
      %p185 = scmp.eq.s32.totalorder %s27, 1
      %p186 = por %p184, %p185
      %p188 = scmp.ne.s32.totalorder %s171, %s187
      %p189 = scmp.eq.s32.totalorder %s27, 0
      %p190 = por %p188, %p189
      %p191 = scmp.le.s32.totalorder 1, %s21
      %p192 = scmp.lt.s32.totalorder %s21, 3
      %p193 = pnand %p191, %p192
      %p194 = pneg %p193
      // Predicated region
      $region9: #{tpu_custom_call.1} parent=5 // pred_check
        _
      $region10: #{tpu_custom_call.1} parent=5 // pred_check_branch
        %196 = sbr.rel (%p193) target = $region12
      $region11: #{tpu_custom_call.1} parent=5 // pred_region
        %s197 = ssub.s32 %s21, 1
        // Predicated region
        $region13: #{tpu_custom_call.1} parent=11 // pred_check
          %p198 = pneg %p134
        $region14: #{tpu_custom_call.1} parent=11 // pred_check_branch
          %200 = sbr.rel (%p198) target = $region16
        $region15: #{tpu_custom_call.1} parent=11 // pred_region
          %s202 = ssub.s32 2048, 2048
          %203 = vsyncadd [#allocation9], %s202
          %s204 = sshll.u32 [#allocation8], 4
          %s205 = int_to_ptr.vmem [resolvable:$true] %s204
          %210 = dma.hbm_to_vmem [thread:$0]  %s3, 2048, %s205, [#allocation9], 64, 64, 4
        $region16: #{tpu_custom_call.1} parent=11 // pred_fallthru
          _
        // Predicated region
        $region17: #{tpu_custom_call.1} parent=11 // pred_check
          %p211 = pneg %p155
        $region18: #{tpu_custom_call.1} parent=11 // pred_check_branch
          %213 = sbr.rel (%p211) target = $region20
        $region19: #{tpu_custom_call.1} parent=11 // pred_region
          _
        $region20: #{tpu_custom_call.1} parent=11 // pred_fallthru
          _
      $region12: #{tpu_custom_call.1} parent=5 // pred_fallthru
        _
      %p214 = scmp.lt.s32.totalorder %s21, 2
      // Predicated region
      $region21: #{tpu_custom_call.1} parent=5 // pred_check
        %p215 = pneg %p214
      $region22: #{tpu_custom_call.1} parent=5 // pred_check_branch
        %217 = sbr.rel (%p215) target = $region24
      $region23: #{tpu_custom_call.1} parent=5 // pred_region
        // Predicated region
        $region25: #{tpu_custom_call.1} parent=23 // pred_check
          %p218 = pneg %p55
        $region26: #{tpu_custom_call.1} parent=23 // pred_check_branch
          %220 = sbr.rel (%p218) target = $region28
        $region27: #{tpu_custom_call.1} parent=23 // pred_region
          %s221 = sand.u32 %s45, 1
          %s222 = scalar_lea.sflag [#allocation3], %s221
          %s223 = sand.u32 %s45, 1
          %s224 = smul.addr %s223, 512
          %s225 = scalar_lea.vmem [#allocation2], %s224
          %s226 = smul.u32 32, %s29
          %s228 = ssub.s32 8192, 8192
          %229 = vsyncadd %s222, %s228
          %s230 = smul.addr %s226, 2
          %s231 = smul.addr %s28, 64
          %s232 = sadd.s32 %s230, %s231
          %s233 = smul.addr %s232, 128
          %s234 = scalar_lea.hbm %s0, %s233
          %s235 = sshll.u32 %s225, 4
          %s236 = int_to_ptr.vmem [resolvable:$true] %s235
          %241 = dma.hbm_to_vmem [thread:$0]  %s234, 8192, %s236, %s222, 256, 256, 16
        $region28: #{tpu_custom_call.1} parent=23 // pred_fallthru
          _
        // Predicated region
        $region29: #{tpu_custom_call.1} parent=23 // pred_check
          %p242 = pneg %p81
        $region30: #{tpu_custom_call.1} parent=23 // pred_check_branch
          %244 = sbr.rel (%p242) target = $region32
        $region31: #{tpu_custom_call.1} parent=23 // pred_region
          %s245 = sand.u32 %s21, 1
          %s246 = scalar_lea.sflag [#allocation6], %s245
          %s247 = sand.u32 %s71, 1
          %s248 = smul.addr %s247, 2
          %s249 = scalar_lea.vmem [#allocation5], %s248
          %s251 = ssub.s32 32, 32
          %252 = vsyncadd %s246, %s251
          %s253 = smul.addr %s28, 2
          %s254 = smul.addr %s253, 16
          %s255 = scalar_lea.hbm %s1, %s254
          %s257 = sshll.u32 %s249, 4
          %s258 = int_to_ptr.vmem [resolvable:$true] %s257
          %260 = dma.hbm_to_vmem [thread:$0]  %s255, 32, %s258, %s246
        $region32: #{tpu_custom_call.1} parent=23 // pred_fallthru
          _
        // Predicated region
        $region33: #{tpu_custom_call.1} parent=23 // pred_check
          %p261 = pneg %p107
        $region34: #{tpu_custom_call.1} parent=23 // pred_check_branch
          %263 = sbr.rel (%p261) target = $region36
        $region35: #{tpu_custom_call.1} parent=23 // pred_region
          %s264 = sand.u32 %s21, 1
          %s265 = scalar_lea.sflag [#allocation6], %s264
          %s266 = sand.u32 %s97, 1
          %s267 = smul.addr %s266, 2
          %s268 = scalar_lea.vmem [#allocation7], %s267
          %s270 = ssub.s32 32, 32
          %271 = vsyncadd %s265, %s270
          %s272 = smul.addr %s28, 2
          %s273 = smul.addr %s272, 16
          %s274 = scalar_lea.hbm %s2, %s273
          %s276 = sshll.u32 %s268, 4
          %s277 = int_to_ptr.vmem [resolvable:$true] %s276
          %279 = dma.hbm_to_vmem [thread:$0]  %s274, 32, %s277, %s265
        $region36: #{tpu_custom_call.1} parent=23 // pred_fallthru
          _
      $region24: #{tpu_custom_call.1} parent=5 // pred_fallthru
        _
      %p280 = scmp.le.s32.totalorder 1, %s21
      %p281 = scmp.lt.s32.totalorder %s21, 3
      %p282 = pnand %p280, %p281
      %p283 = pneg %p282
      // Predicated region
      $region37: #{tpu_custom_call.1} parent=5 // pred_check
        _
      $region38: #{tpu_custom_call.1} parent=5 // pred_check_branch
        %285 = sbr.rel (%p282) target = $region40
      $region39: #{tpu_custom_call.1} parent=5 // pred_region
        %s286 = ssub.s32 %s21, 1
        %s287 = sand.u32 %s48, 1
        %s288 = scalar_lea.sflag [#allocation3], %s287
        %s289 = sand.u32 %s48, 1
        %s290 = smul.addr %s289, 512
        %s291 = scalar_lea.vmem [#allocation2], %s290
        // Predicated region
        $region41: #{tpu_custom_call.1} parent=39 // pred_check
          %p292 = pneg %p61
        $region42: #{tpu_custom_call.1} parent=39 // pred_check_branch
          %294 = sbr.rel (%p292) target = $region44
        $region43: #{tpu_custom_call.1} parent=39 // pred_region
          %295 = dma.done %s288, 8192
        $region44: #{tpu_custom_call.1} parent=39 // pred_fallthru
          _
        %s296 = sand.u32 %s26, 1
        %s297 = scalar_lea.sflag [#allocation6], %s296
        %s298 = sand.u32 %s74, 1
        %s299 = smul.addr %s298, 2
        %s300 = scalar_lea.vmem [#allocation5], %s299
        // Predicated region
        $region45: #{tpu_custom_call.1} parent=39 // pred_check
          %p301 = pneg %p87
        $region46: #{tpu_custom_call.1} parent=39 // pred_check_branch
          %303 = sbr.rel (%p301) target = $region48
        $region47: #{tpu_custom_call.1} parent=39 // pred_region
          %304 = dma.done %s297, 32
        $region48: #{tpu_custom_call.1} parent=39 // pred_fallthru
          _
        %s305 = sand.u32 %s26, 1
        %s306 = scalar_lea.sflag [#allocation6], %s305
        %s307 = sand.u32 %s100, 1
        %s308 = smul.addr %s307, 2
        %s309 = scalar_lea.vmem [#allocation7], %s308
        // Predicated region
        $region49: #{tpu_custom_call.1} parent=39 // pred_check
          %p310 = pneg %p113
        $region50: #{tpu_custom_call.1} parent=39 // pred_check_branch
          %312 = sbr.rel (%p310) target = $region52
        $region51: #{tpu_custom_call.1} parent=39 // pred_region
          %313 = dma.done %s306, 32
        $region52: #{tpu_custom_call.1} parent=39 // pred_fallthru
          _
        // Predicated region
        $region53: #{tpu_custom_call.1} parent=39 // pred_check
          %p314 = pneg %p134
        $region54: #{tpu_custom_call.1} parent=39 // pred_check_branch
          %316 = sbr.rel (%p314) target = $region56
        $region55: #{tpu_custom_call.1} parent=39 // pred_region
          %317 = dma.done [#allocation9], 2048
        $region56: #{tpu_custom_call.1} parent=39 // pred_fallthru
          _
        %s318 = sand.u32 %s48, 1
        %s319 = scalar_lea.sflag [#allocation3], %s318
        %s320 = sand.u32 %s48, 1
        %s321 = smul.addr %s320, 512
        %s322 = scalar_lea.vmem [#allocation2], %s321
        %p323 = pneg %p61
        %p324 = pneg %p58
        %s325 = sand.u32 %s26, 1
        %s326 = scalar_lea.sflag [#allocation6], %s325
        %s327 = sand.u32 %s74, 1
        %s328 = smul.addr %s327, 2
        %s329 = scalar_lea.vmem [#allocation5], %s328
        %p330 = pneg %p87
        %p331 = pneg %p84
        %s332 = sand.u32 %s26, 1
        %s333 = scalar_lea.sflag [#allocation6], %s332
        %s334 = sand.u32 %s100, 1
        %s335 = smul.addr %s334, 2
        %s336 = scalar_lea.vmem [#allocation7], %s335
        %p337 = pneg %p113
        %p338 = pneg %p110
        %p339 = pneg %p134
        %p340 = pneg %p131
        %p341 = pneg %p155
        %p342 = pneg %p152
        %p343 = pneg %p183
        %p344 = pneg %p180
        %s345 = sand.u32 %s170, 1
        %s346 = scalar_lea.sflag [#allocation4], %s345
        %s347 = sand.u32 %s170, 1
        %s348 = smul.addr %s347, 256
        %s349 = scalar_lea.vmem [#allocation10], %s348
        %s350 = smul.u32 32, %s31
        %s351 = smul.u32 32, %s31
        %v353 = vld [vmem:[%s291] sm:$0xff]
        %v354 = vld [vmem:[%s291 + $0x8] sm:$0xff]
        %v355 = vld [vmem:[%s291 + $0x10] sm:$0xff]
        %v356 = vld [vmem:[%s291 + $0x18] sm:$0xff]
        %v357 = vld [vmem:[%s291 + $0x20] sm:$0xff]
        %v358 = vld [vmem:[%s291 + $0x28] sm:$0xff]
        %v359 = vld [vmem:[%s291 + $0x30] sm:$0xff]
        %v360 = vld [vmem:[%s291 + $0x38] sm:$0xff]
        %v361 = vld [vmem:[%s291 + $0x40] sm:$0xff]
        %v362 = vld [vmem:[%s291 + $0x48] sm:$0xff]
        %v363 = vld [vmem:[%s291 + $0x50] sm:$0xff]
        %v364 = vld [vmem:[%s291 + $0x58] sm:$0xff]
        %v365 = vld [vmem:[%s291 + $0x60] sm:$0xff]
        %v366 = vld [vmem:[%s291 + $0x68] sm:$0xff]
        %v367 = vld [vmem:[%s291 + $0x70] sm:$0xff]
        %v368 = vld [vmem:[%s291 + $0x78] sm:$0xff]
        %v369 = vld [vmem:[%s291 + $0x80] sm:$0xff]
        %v370 = vld [vmem:[%s291 + $0x88] sm:$0xff]
        %v371 = vld [vmem:[%s291 + $0x90] sm:$0xff]
        %v372 = vld [vmem:[%s291 + $0x98] sm:$0xff]
        %v373 = vld [vmem:[%s291 + $0xa0] sm:$0xff]
        %v374 = vld [vmem:[%s291 + $0xa8] sm:$0xff]
        %v375 = vld [vmem:[%s291 + $0xb0] sm:$0xff]
        %v376 = vld [vmem:[%s291 + $0xb8] sm:$0xff]
        %v377 = vld [vmem:[%s291 + $0xc0] sm:$0xff]
        %v378 = vld [vmem:[%s291 + $0xc8] sm:$0xff]
        %v379 = vld [vmem:[%s291 + $0xd0] sm:$0xff]
        %v380 = vld [vmem:[%s291 + $0xd8] sm:$0xff]
        %v381 = vld [vmem:[%s291 + $0xe0] sm:$0xff]
        %v382 = vld [vmem:[%s291 + $0xe8] sm:$0xff]
        %v383 = vld [vmem:[%s291 + $0xf0] sm:$0xff]
        %v384 = vld [vmem:[%s291 + $0xf8] sm:$0xff]
        %v385 = vld [vmem:[%s291 + $0x100] sm:$0xff]
        %v386 = vld [vmem:[%s291 + $0x108] sm:$0xff]
        %v387 = vld [vmem:[%s291 + $0x110] sm:$0xff]
        %v388 = vld [vmem:[%s291 + $0x118] sm:$0xff]
        %v389 = vld [vmem:[%s291 + $0x120] sm:$0xff]
        %v390 = vld [vmem:[%s291 + $0x128] sm:$0xff]
        %v391 = vld [vmem:[%s291 + $0x130] sm:$0xff]
        %v392 = vld [vmem:[%s291 + $0x138] sm:$0xff]
        %v393 = vld [vmem:[%s291 + $0x140] sm:$0xff]
        %v394 = vld [vmem:[%s291 + $0x148] sm:$0xff]
        %v395 = vld [vmem:[%s291 + $0x150] sm:$0xff]
        %v396 = vld [vmem:[%s291 + $0x158] sm:$0xff]
        %v397 = vld [vmem:[%s291 + $0x160] sm:$0xff]
        %v398 = vld [vmem:[%s291 + $0x168] sm:$0xff]
        %v399 = vld [vmem:[%s291 + $0x170] sm:$0xff]
        %v400 = vld [vmem:[%s291 + $0x178] sm:$0xff]
        %v401 = vld [vmem:[%s291 + $0x180] sm:$0xff]
        %v402 = vld [vmem:[%s291 + $0x188] sm:$0xff]
        %v403 = vld [vmem:[%s291 + $0x190] sm:$0xff]
        %v404 = vld [vmem:[%s291 + $0x198] sm:$0xff]
        %v405 = vld [vmem:[%s291 + $0x1a0] sm:$0xff]
        %v406 = vld [vmem:[%s291 + $0x1a8] sm:$0xff]
        %v407 = vld [vmem:[%s291 + $0x1b0] sm:$0xff]
        %v408 = vld [vmem:[%s291 + $0x1b8] sm:$0xff]
        %v409 = vld [vmem:[%s291 + $0x1c0] sm:$0xff]
        %v410 = vld [vmem:[%s291 + $0x1c8] sm:$0xff]
        %v411 = vld [vmem:[%s291 + $0x1d0] sm:$0xff]
        %v412 = vld [vmem:[%s291 + $0x1d8] sm:$0xff]
        %v413 = vld [vmem:[%s291 + $0x1e0] sm:$0xff]
        %v414 = vld [vmem:[%s291 + $0x1e8] sm:$0xff]
        %v415 = vld [vmem:[%s291 + $0x1f0] sm:$0xff]
        %v416 = vld [vmem:[%s291 + $0x1f8] sm:$0xff]
        %v417 = vadd.f32 %v353, %v354
        %418 = vadd.xlane.f32.xlu0 %v417
        %v419 = vpop.xlane.xlu0 %418
        %v420 = vadd.f32 %v355, %v356
        %421 = vadd.xlane.f32.xlu0 %v420
        %v422 = vpop.xlane.xlu0 %421
        %v423 = vadd.f32 %v357, %v358
        %424 = vadd.xlane.f32.xlu0 %v423
        %v425 = vpop.xlane.xlu0 %424
        %v426 = vadd.f32 %v359, %v360
        %427 = vadd.xlane.f32.xlu0 %v426
        %v428 = vpop.xlane.xlu0 %427
        %v429 = vadd.f32 %v361, %v362
        %430 = vadd.xlane.f32.xlu0 %v429
        %v431 = vpop.xlane.xlu0 %430
        %v432 = vadd.f32 %v363, %v364
        %433 = vadd.xlane.f32.xlu0 %v432
        %v434 = vpop.xlane.xlu0 %433
        %v435 = vadd.f32 %v365, %v366
        %436 = vadd.xlane.f32.xlu0 %v435
        %v437 = vpop.xlane.xlu0 %436
        %v438 = vadd.f32 %v367, %v368
        %439 = vadd.xlane.f32.xlu0 %v438
        %v440 = vpop.xlane.xlu0 %439
        %v441 = vadd.f32 %v369, %v370
        %442 = vadd.xlane.f32.xlu0 %v441
        %v443 = vpop.xlane.xlu0 %442
        %v444 = vadd.f32 %v371, %v372
        %445 = vadd.xlane.f32.xlu0 %v444
        %v446 = vpop.xlane.xlu0 %445
        %v447 = vadd.f32 %v373, %v374
        %448 = vadd.xlane.f32.xlu0 %v447
        %v449 = vpop.xlane.xlu0 %448
        %v450 = vadd.f32 %v375, %v376
        %451 = vadd.xlane.f32.xlu0 %v450
        %v452 = vpop.xlane.xlu0 %451
        %v453 = vadd.f32 %v377, %v378
        %454 = vadd.xlane.f32.xlu0 %v453
        %v455 = vpop.xlane.xlu0 %454
        %v456 = vadd.f32 %v379, %v380
        %457 = vadd.xlane.f32.xlu0 %v456
        %v458 = vpop.xlane.xlu0 %457
        %v459 = vadd.f32 %v381, %v382
        %460 = vadd.xlane.f32.xlu0 %v459
        %v461 = vpop.xlane.xlu0 %460
        %v462 = vadd.f32 %v383, %v384
        %463 = vadd.xlane.f32.xlu0 %v462
        %v464 = vpop.xlane.xlu0 %463
        %v465 = vadd.f32 %v385, %v386
        %466 = vadd.xlane.f32.xlu0 %v465
        %v467 = vpop.xlane.xlu0 %466
        %v468 = vadd.f32 %v387, %v388
        %469 = vadd.xlane.f32.xlu0 %v468
        %v470 = vpop.xlane.xlu0 %469
        %v471 = vadd.f32 %v389, %v390
        %472 = vadd.xlane.f32.xlu0 %v471
        %v473 = vpop.xlane.xlu0 %472
        %v474 = vadd.f32 %v391, %v392
        %475 = vadd.xlane.f32.xlu0 %v474
        %v476 = vpop.xlane.xlu0 %475
        %v477 = vadd.f32 %v393, %v394
        %478 = vadd.xlane.f32.xlu0 %v477
        %v479 = vpop.xlane.xlu0 %478
        %v480 = vadd.f32 %v395, %v396
        %481 = vadd.xlane.f32.xlu0 %v480
        %v482 = vpop.xlane.xlu0 %481
        %v483 = vadd.f32 %v397, %v398
        %484 = vadd.xlane.f32.xlu0 %v483
        %v485 = vpop.xlane.xlu0 %484
        %v486 = vadd.f32 %v399, %v400
        %487 = vadd.xlane.f32.xlu0 %v486
        %v488 = vpop.xlane.xlu0 %487
        %v489 = vadd.f32 %v401, %v402
        %490 = vadd.xlane.f32.xlu0 %v489
        %v491 = vpop.xlane.xlu0 %490
        %v492 = vadd.f32 %v403, %v404
        %493 = vadd.xlane.f32.xlu0 %v492
        %v494 = vpop.xlane.xlu0 %493
        %v495 = vadd.f32 %v405, %v406
        %496 = vadd.xlane.f32.xlu0 %v495
        %v497 = vpop.xlane.xlu0 %496
        %v498 = vadd.f32 %v407, %v408
        %499 = vadd.xlane.f32.xlu0 %v498
        %v500 = vpop.xlane.xlu0 %499
        %v501 = vadd.f32 %v409, %v410
        %502 = vadd.xlane.f32.xlu0 %v501
        %v503 = vpop.xlane.xlu0 %502
        %v504 = vadd.f32 %v411, %v412
        %505 = vadd.xlane.f32.xlu0 %v504
        %v506 = vpop.xlane.xlu0 %505
        %v507 = vadd.f32 %v413, %v414
        %508 = vadd.xlane.f32.xlu0 %v507
        %v509 = vpop.xlane.xlu0 %508
        %v510 = vadd.f32 %v415, %v416
        %511 = vadd.xlane.f32.xlu0 %v510
        %v512 = vpop.xlane.xlu0 %511
        %v513 = vrcp.pop 256.0
        %v514 = vmul.f32 %v419, %v513
        %v515 = vmul.f32 %v422, %v513
        %v516 = vmul.f32 %v425, %v513
        %v517 = vmul.f32 %v428, %v513
        %v518 = vmul.f32 %v431, %v513
        %v519 = vmul.f32 %v434, %v513
        %v520 = vmul.f32 %v437, %v513
        %v521 = vmul.f32 %v440, %v513
        %v522 = vmul.f32 %v443, %v513
        %v523 = vmul.f32 %v446, %v513
        %v524 = vmul.f32 %v449, %v513
        %v525 = vmul.f32 %v452, %v513
        %v526 = vmul.f32 %v455, %v513
        %v527 = vmul.f32 %v458, %v513
        %v528 = vmul.f32 %v461, %v513
        %v529 = vmul.f32 %v464, %v513
        %v530 = vmul.f32 %v467, %v513
        %v531 = vmul.f32 %v470, %v513
        %v532 = vmul.f32 %v473, %v513
        %v533 = vmul.f32 %v476, %v513
        %v534 = vmul.f32 %v479, %v513
        %v535 = vmul.f32 %v482, %v513
        %v536 = vmul.f32 %v485, %v513
        %v537 = vmul.f32 %v488, %v513
        %v538 = vmul.f32 %v491, %v513
        %v539 = vmul.f32 %v494, %v513
        %v540 = vmul.f32 %v497, %v513
        %v541 = vmul.f32 %v500, %v513
        %v542 = vmul.f32 %v503, %v513
        %v543 = vmul.f32 %v506, %v513
        %v544 = vmul.f32 %v509, %v513
        %v545 = vmul.f32 %v512, %v513
        %v546 = vsub.f32 %v353, %v514
        %v547 = vsub.f32 %v354, %v514
        %v548 = vsub.f32 %v355, %v515
        %v549 = vsub.f32 %v356, %v515
        %v550 = vsub.f32 %v357, %v516
        %v551 = vsub.f32 %v358, %v516
        %v552 = vsub.f32 %v359, %v517
        %v553 = vsub.f32 %v360, %v517
        %v554 = vsub.f32 %v361, %v518
        %v555 = vsub.f32 %v362, %v518
        %v556 = vsub.f32 %v363, %v519
        %v557 = vsub.f32 %v364, %v519
        %v558 = vsub.f32 %v365, %v520
        %v559 = vsub.f32 %v366, %v520
        %v560 = vsub.f32 %v367, %v521
        %v561 = vsub.f32 %v368, %v521
        %v562 = vsub.f32 %v369, %v522
        %v563 = vsub.f32 %v370, %v522
        %v564 = vsub.f32 %v371, %v523
        %v565 = vsub.f32 %v372, %v523
        %v566 = vsub.f32 %v373, %v524
        %v567 = vsub.f32 %v374, %v524
        %v568 = vsub.f32 %v375, %v525
        %v569 = vsub.f32 %v376, %v525
        %v570 = vsub.f32 %v377, %v526
        %v571 = vsub.f32 %v378, %v526
        %v572 = vsub.f32 %v379, %v527
        %v573 = vsub.f32 %v380, %v527
        %v574 = vsub.f32 %v381, %v528
        %v575 = vsub.f32 %v382, %v528
        %v576 = vsub.f32 %v383, %v529
        %v577 = vsub.f32 %v384, %v529
        %v578 = vsub.f32 %v385, %v530
        %v579 = vsub.f32 %v386, %v530
        %v580 = vsub.f32 %v387, %v531
        %v581 = vsub.f32 %v388, %v531
        %v582 = vsub.f32 %v389, %v532
        %v583 = vsub.f32 %v390, %v532
        %v584 = vsub.f32 %v391, %v533
        %v585 = vsub.f32 %v392, %v533
        %v586 = vsub.f32 %v393, %v534
        %v587 = vsub.f32 %v394, %v534
        %v588 = vsub.f32 %v395, %v535
        %v589 = vsub.f32 %v396, %v535
        %v590 = vsub.f32 %v397, %v536
        %v591 = vsub.f32 %v398, %v536
        %v592 = vsub.f32 %v399, %v537
        %v593 = vsub.f32 %v400, %v537
        %v594 = vsub.f32 %v401, %v538
        %v595 = vsub.f32 %v402, %v538
        %v596 = vsub.f32 %v403, %v539
        %v597 = vsub.f32 %v404, %v539
        %v598 = vsub.f32 %v405, %v540
        %v599 = vsub.f32 %v406, %v540
        %v600 = vsub.f32 %v407, %v541
        %v601 = vsub.f32 %v408, %v541
        %v602 = vsub.f32 %v409, %v542
        %v603 = vsub.f32 %v410, %v542
        %v604 = vsub.f32 %v411, %v543
        %v605 = vsub.f32 %v412, %v543
        %v606 = vsub.f32 %v413, %v544
        %v607 = vsub.f32 %v414, %v544
        %v608 = vsub.f32 %v415, %v545
        %v609 = vsub.f32 %v416, %v545
        %v610 = vmul.f32 %v546, %v546
        %v611 = vmul.f32 %v547, %v547
        %v612 = vmul.f32 %v548, %v548
        %v613 = vmul.f32 %v549, %v549
        %v614 = vmul.f32 %v550, %v550
        %v615 = vmul.f32 %v551, %v551
        %v616 = vmul.f32 %v552, %v552
        %v617 = vmul.f32 %v553, %v553
        %v618 = vmul.f32 %v554, %v554
        %v619 = vmul.f32 %v555, %v555
        %v620 = vmul.f32 %v556, %v556
        %v621 = vmul.f32 %v557, %v557
        %v622 = vmul.f32 %v558, %v558
        %v623 = vmul.f32 %v559, %v559
        %v624 = vmul.f32 %v560, %v560
        %v625 = vmul.f32 %v561, %v561
        %v626 = vmul.f32 %v562, %v562
        %v627 = vmul.f32 %v563, %v563
        %v628 = vmul.f32 %v564, %v564
        %v629 = vmul.f32 %v565, %v565
        %v630 = vmul.f32 %v566, %v566
        %v631 = vmul.f32 %v567, %v567
        %v632 = vmul.f32 %v568, %v568
        %v633 = vmul.f32 %v569, %v569
        %v634 = vmul.f32 %v570, %v570
        %v635 = vmul.f32 %v571, %v571
        %v636 = vmul.f32 %v572, %v572
        %v637 = vmul.f32 %v573, %v573
        %v638 = vmul.f32 %v574, %v574
        %v639 = vmul.f32 %v575, %v575
        %v640 = vmul.f32 %v576, %v576
        %v641 = vmul.f32 %v577, %v577
        %v642 = vmul.f32 %v578, %v578
        %v643 = vmul.f32 %v579, %v579
        %v644 = vmul.f32 %v580, %v580
        %v645 = vmul.f32 %v581, %v581
        %v646 = vmul.f32 %v582, %v582
        %v647 = vmul.f32 %v583, %v583
        %v648 = vmul.f32 %v584, %v584
        %v649 = vmul.f32 %v585, %v585
        %v650 = vmul.f32 %v586, %v586
        %v651 = vmul.f32 %v587, %v587
        %v652 = vmul.f32 %v588, %v588
        %v653 = vmul.f32 %v589, %v589
        %v654 = vmul.f32 %v590, %v590
        %v655 = vmul.f32 %v591, %v591
        %v656 = vmul.f32 %v592, %v592
        %v657 = vmul.f32 %v593, %v593
        %v658 = vmul.f32 %v594, %v594
        %v659 = vmul.f32 %v595, %v595
        %v660 = vmul.f32 %v596, %v596
        %v661 = vmul.f32 %v597, %v597
        %v662 = vmul.f32 %v598, %v598
        %v663 = vmul.f32 %v599, %v599
        %v664 = vmul.f32 %v600, %v600
        %v665 = vmul.f32 %v601, %v601
        %v666 = vmul.f32 %v602, %v602
        %v667 = vmul.f32 %v603, %v603
        %v668 = vmul.f32 %v604, %v604
        %v669 = vmul.f32 %v605, %v605
        %v670 = vmul.f32 %v606, %v606
        %v671 = vmul.f32 %v607, %v607
        %v672 = vmul.f32 %v608, %v608
        %v673 = vmul.f32 %v609, %v609
        %v674 = vadd.f32 %v610, %v611
        %675 = vadd.xlane.f32.xlu0 %v674
        %v676 = vpop.xlane.xlu0 %675
        %v677 = vadd.f32 %v612, %v613
        %678 = vadd.xlane.f32.xlu0 %v677
        %v679 = vpop.xlane.xlu0 %678
        %v680 = vadd.f32 %v614, %v615
        %681 = vadd.xlane.f32.xlu0 %v680
        %v682 = vpop.xlane.xlu0 %681
        %v683 = vadd.f32 %v616, %v617
        %684 = vadd.xlane.f32.xlu0 %v683
        %v685 = vpop.xlane.xlu0 %684
        %v686 = vadd.f32 %v618, %v619
        %687 = vadd.xlane.f32.xlu0 %v686
        %v688 = vpop.xlane.xlu0 %687
        %v689 = vadd.f32 %v620, %v621
        %690 = vadd.xlane.f32.xlu0 %v689
        %v691 = vpop.xlane.xlu0 %690
        %v692 = vadd.f32 %v622, %v623
        %693 = vadd.xlane.f32.xlu0 %v692
        %v694 = vpop.xlane.xlu0 %693
        %v695 = vadd.f32 %v624, %v625
        %696 = vadd.xlane.f32.xlu0 %v695
        %v697 = vpop.xlane.xlu0 %696
        %v698 = vadd.f32 %v626, %v627
        %699 = vadd.xlane.f32.xlu0 %v698
        %v700 = vpop.xlane.xlu0 %699
        %v701 = vadd.f32 %v628, %v629
        %702 = vadd.xlane.f32.xlu0 %v701
        %v703 = vpop.xlane.xlu0 %702
        %v704 = vadd.f32 %v630, %v631
        %705 = vadd.xlane.f32.xlu0 %v704
        %v706 = vpop.xlane.xlu0 %705
        %v707 = vadd.f32 %v632, %v633
        %708 = vadd.xlane.f32.xlu0 %v707
        %v709 = vpop.xlane.xlu0 %708
        %v710 = vadd.f32 %v634, %v635
        %711 = vadd.xlane.f32.xlu0 %v710
        %v712 = vpop.xlane.xlu0 %711
        %v713 = vadd.f32 %v636, %v637
        %714 = vadd.xlane.f32.xlu0 %v713
        %v715 = vpop.xlane.xlu0 %714
        %v716 = vadd.f32 %v638, %v639
        %717 = vadd.xlane.f32.xlu0 %v716
        %v718 = vpop.xlane.xlu0 %717
        %v719 = vadd.f32 %v640, %v641
        %720 = vadd.xlane.f32.xlu0 %v719
        %v721 = vpop.xlane.xlu0 %720
        %v722 = vadd.f32 %v642, %v643
        %723 = vadd.xlane.f32.xlu0 %v722
        %v724 = vpop.xlane.xlu0 %723
        %v725 = vadd.f32 %v644, %v645
        %726 = vadd.xlane.f32.xlu0 %v725
        %v727 = vpop.xlane.xlu0 %726
        %v728 = vadd.f32 %v646, %v647
        %729 = vadd.xlane.f32.xlu0 %v728
        %v730 = vpop.xlane.xlu0 %729
        %v731 = vadd.f32 %v648, %v649
        %732 = vadd.xlane.f32.xlu0 %v731
        %v733 = vpop.xlane.xlu0 %732
        %v734 = vadd.f32 %v650, %v651
        %735 = vadd.xlane.f32.xlu0 %v734
        %v736 = vpop.xlane.xlu0 %735
        %v737 = vadd.f32 %v652, %v653
        %738 = vadd.xlane.f32.xlu0 %v737
        %v739 = vpop.xlane.xlu0 %738
        %v740 = vadd.f32 %v654, %v655
        %741 = vadd.xlane.f32.xlu0 %v740
        %v742 = vpop.xlane.xlu0 %741
        %v743 = vadd.f32 %v656, %v657
        %744 = vadd.xlane.f32.xlu0 %v743
        %v745 = vpop.xlane.xlu0 %744
        %v746 = vadd.f32 %v658, %v659
        %747 = vadd.xlane.f32.xlu0 %v746
        %v748 = vpop.xlane.xlu0 %747
        %v749 = vadd.f32 %v660, %v661
        %750 = vadd.xlane.f32.xlu0 %v749
        %v751 = vpop.xlane.xlu0 %750
        %v752 = vadd.f32 %v662, %v663
        %753 = vadd.xlane.f32.xlu0 %v752
        %v754 = vpop.xlane.xlu0 %753
        %v755 = vadd.f32 %v664, %v665
        %756 = vadd.xlane.f32.xlu0 %v755
        %v757 = vpop.xlane.xlu0 %756
        %v758 = vadd.f32 %v666, %v667
        %759 = vadd.xlane.f32.xlu0 %v758
        %v760 = vpop.xlane.xlu0 %759
        %v761 = vadd.f32 %v668, %v669
        %762 = vadd.xlane.f32.xlu0 %v761
        %v763 = vpop.xlane.xlu0 %762
        %v764 = vadd.f32 %v670, %v671
        %765 = vadd.xlane.f32.xlu0 %v764
        %v766 = vpop.xlane.xlu0 %765
        %v767 = vadd.f32 %v672, %v673
        %768 = vadd.xlane.f32.xlu0 %v767
        %v769 = vpop.xlane.xlu0 %768
        %v770 = vmul.f32 %v676, %v513
        %v771 = vmul.f32 %v679, %v513
        %v772 = vmul.f32 %v682, %v513
        %v773 = vmul.f32 %v685, %v513
        %v774 = vmul.f32 %v688, %v513
        %v775 = vmul.f32 %v691, %v513
        %v776 = vmul.f32 %v694, %v513
        %v777 = vmul.f32 %v697, %v513
        %v778 = vmul.f32 %v700, %v513
        %v779 = vmul.f32 %v703, %v513
        %v780 = vmul.f32 %v706, %v513
        %v781 = vmul.f32 %v709, %v513
        %v782 = vmul.f32 %v712, %v513
        %v783 = vmul.f32 %v715, %v513
        %v784 = vmul.f32 %v718, %v513
        %v785 = vmul.f32 %v721, %v513
        %v786 = vmul.f32 %v724, %v513
        %v787 = vmul.f32 %v727, %v513
        %v788 = vmul.f32 %v730, %v513
        %v789 = vmul.f32 %v733, %v513
        %v790 = vmul.f32 %v736, %v513
        %v791 = vmul.f32 %v739, %v513
        %v792 = vmul.f32 %v742, %v513
        %v793 = vmul.f32 %v745, %v513
        %v794 = vmul.f32 %v748, %v513
        %v795 = vmul.f32 %v751, %v513
        %v796 = vmul.f32 %v754, %v513
        %v797 = vmul.f32 %v757, %v513
        %v798 = vmul.f32 %v760, %v513
        %v799 = vmul.f32 %v763, %v513
        %v800 = vmul.f32 %v766, %v513
        %v801 = vmul.f32 %v769, %v513
        %v802 = vadd.f32 %v770, 1e-06
        %v803 = vadd.f32 %v771, 1e-06
        %v804 = vadd.f32 %v772, 1e-06
        %v805 = vadd.f32 %v773, 1e-06
        %v806 = vadd.f32 %v774, 1e-06
        %v807 = vadd.f32 %v775, 1e-06
        %v808 = vadd.f32 %v776, 1e-06
        %v809 = vadd.f32 %v777, 1e-06
        %v810 = vadd.f32 %v778, 1e-06
        %v811 = vadd.f32 %v779, 1e-06
        %v812 = vadd.f32 %v780, 1e-06
        %v813 = vadd.f32 %v781, 1e-06
        %v814 = vadd.f32 %v782, 1e-06
        %v815 = vadd.f32 %v783, 1e-06
        %v816 = vadd.f32 %v784, 1e-06
        %v817 = vadd.f32 %v785, 1e-06
        %v818 = vadd.f32 %v786, 1e-06
        %v819 = vadd.f32 %v787, 1e-06
        %v820 = vadd.f32 %v788, 1e-06
        %v821 = vadd.f32 %v789, 1e-06
        %v822 = vadd.f32 %v790, 1e-06
        %v823 = vadd.f32 %v791, 1e-06
        %v824 = vadd.f32 %v792, 1e-06
        %v825 = vadd.f32 %v793, 1e-06
        %v826 = vadd.f32 %v794, 1e-06
        %v827 = vadd.f32 %v795, 1e-06
        %v828 = vadd.f32 %v796, 1e-06
        %v829 = vadd.f32 %v797, 1e-06
        %v830 = vadd.f32 %v798, 1e-06
        %v831 = vadd.f32 %v799, 1e-06
        %v832 = vadd.f32 %v800, 1e-06
        %v833 = vadd.f32 %v801, 1e-06
        %v834 = vrsqrt.pop %v802
        %v835 = vrsqrt.pop %v803
        %v836 = vrsqrt.pop %v804
        %v837 = vrsqrt.pop %v805
        %v838 = vrsqrt.pop %v806
        %v839 = vrsqrt.pop %v807
        %v840 = vrsqrt.pop %v808
        %v841 = vrsqrt.pop %v809
        %v842 = vrsqrt.pop %v810
        %v843 = vrsqrt.pop %v811
        %v844 = vrsqrt.pop %v812
        %v845 = vrsqrt.pop %v813
        %v846 = vrsqrt.pop %v814
        %v847 = vrsqrt.pop %v815
        %v848 = vrsqrt.pop %v816
        %v849 = vrsqrt.pop %v817
        %v850 = vrsqrt.pop %v818
        %v851 = vrsqrt.pop %v819
        %v852 = vrsqrt.pop %v820
        %v853 = vrsqrt.pop %v821
        %v854 = vrsqrt.pop %v822
        %v855 = vrsqrt.pop %v823
        %v856 = vrsqrt.pop %v824
        %v857 = vrsqrt.pop %v825
        %v858 = vrsqrt.pop %v826
        %v859 = vrsqrt.pop %v827
        %v860 = vrsqrt.pop %v828
        %v861 = vrsqrt.pop %v829
        %v862 = vrsqrt.pop %v830
        %v863 = vrsqrt.pop %v831
        %v864 = vrsqrt.pop %v832
        %v865 = vrsqrt.pop %v833
        %v866 = vmul.f32 %v546, %v834
        %v867 = vmul.f32 %v547, %v834
        %v868 = vmul.f32 %v548, %v835
        %v869 = vmul.f32 %v549, %v835
        %v870 = vmul.f32 %v550, %v836
        %v871 = vmul.f32 %v551, %v836
        %v872 = vmul.f32 %v552, %v837
        %v873 = vmul.f32 %v553, %v837
        %v874 = vmul.f32 %v554, %v838
        %v875 = vmul.f32 %v555, %v838
        %v876 = vmul.f32 %v556, %v839
        %v877 = vmul.f32 %v557, %v839
        %v878 = vmul.f32 %v558, %v840
        %v879 = vmul.f32 %v559, %v840
        %v880 = vmul.f32 %v560, %v841
        %v881 = vmul.f32 %v561, %v841
        %v882 = vmul.f32 %v562, %v842
        %v883 = vmul.f32 %v563, %v842
        %v884 = vmul.f32 %v564, %v843
        %v885 = vmul.f32 %v565, %v843
        %v886 = vmul.f32 %v566, %v844
        %v887 = vmul.f32 %v567, %v844
        %v888 = vmul.f32 %v568, %v845
        %v889 = vmul.f32 %v569, %v845
        %v890 = vmul.f32 %v570, %v846
        %v891 = vmul.f32 %v571, %v846
        %v892 = vmul.f32 %v572, %v847
        %v893 = vmul.f32 %v573, %v847
        %v894 = vmul.f32 %v574, %v848
        %v895 = vmul.f32 %v575, %v848
        %v896 = vmul.f32 %v576, %v849
        %v897 = vmul.f32 %v577, %v849
        %v898 = vmul.f32 %v578, %v850
        %v899 = vmul.f32 %v579, %v850
        %v900 = vmul.f32 %v580, %v851
        %v901 = vmul.f32 %v581, %v851
        %v902 = vmul.f32 %v582, %v852
        %v903 = vmul.f32 %v583, %v852
        %v904 = vmul.f32 %v584, %v853
        %v905 = vmul.f32 %v585, %v853
        %v906 = vmul.f32 %v586, %v854
        %v907 = vmul.f32 %v587, %v854
        %v908 = vmul.f32 %v588, %v855
        %v909 = vmul.f32 %v589, %v855
        %v910 = vmul.f32 %v590, %v856
        %v911 = vmul.f32 %v591, %v856
        %v912 = vmul.f32 %v592, %v857
        %v913 = vmul.f32 %v593, %v857
        %v914 = vmul.f32 %v594, %v858
        %v915 = vmul.f32 %v595, %v858
        %v916 = vmul.f32 %v596, %v859
        %v917 = vmul.f32 %v597, %v859
        %v918 = vmul.f32 %v598, %v860
        %v919 = vmul.f32 %v599, %v860
        %v920 = vmul.f32 %v600, %v861
        %v921 = vmul.f32 %v601, %v861
        %v922 = vmul.f32 %v602, %v862
        %v923 = vmul.f32 %v603, %v862
        %v924 = vmul.f32 %v604, %v863
        %v925 = vmul.f32 %v605, %v863
        %v926 = vmul.f32 %v606, %v864
        %v927 = vmul.f32 %v607, %v864
        %v928 = vmul.f32 %v608, %v865
        %v929 = vmul.f32 %v609, %v865
        %v930 = vld [vmem:[%s309] sm:$0x3]
        %v931 = vadd.f32 %v930, 1.0
        %v933 = vlaneseq
        %v934 = vshrl.u32 %v933, 7
        %v935 = vsub.s32 0, %v934
        %v936 = vrot.slane %v931, %v935
        %v937 = vlaneseq
        %v938 = vshrl.u32 %v937, 7
        %v939 = vsub.s32 1, %v938
        %v940 = vrot.slane %v931, %v939
        %v943 = vmul.f32 %v866, %v936
        %v944 = vmul.f32 %v867, %v940
        %v945 = vmul.f32 %v868, %v936
        %v946 = vmul.f32 %v869, %v940
        %v947 = vmul.f32 %v870, %v936
        %v948 = vmul.f32 %v871, %v940
        %v949 = vmul.f32 %v872, %v936
        %v950 = vmul.f32 %v873, %v940
        %v951 = vmul.f32 %v874, %v936
        %v952 = vmul.f32 %v875, %v940
        %v953 = vmul.f32 %v876, %v936
        %v954 = vmul.f32 %v877, %v940
        %v955 = vmul.f32 %v878, %v936
        %v956 = vmul.f32 %v879, %v940
        %v957 = vmul.f32 %v880, %v936
        %v958 = vmul.f32 %v881, %v940
        %v959 = vmul.f32 %v882, %v936
        %v960 = vmul.f32 %v883, %v940
        %v961 = vmul.f32 %v884, %v936
        %v962 = vmul.f32 %v885, %v940
        %v963 = vmul.f32 %v886, %v936
        %v964 = vmul.f32 %v887, %v940
        %v965 = vmul.f32 %v888, %v936
        %v966 = vmul.f32 %v889, %v940
        %v967 = vmul.f32 %v890, %v936
        %v968 = vmul.f32 %v891, %v940
        %v969 = vmul.f32 %v892, %v936
        %v970 = vmul.f32 %v893, %v940
        %v971 = vmul.f32 %v894, %v936
        %v972 = vmul.f32 %v895, %v940
        %v973 = vmul.f32 %v896, %v936
        %v974 = vmul.f32 %v897, %v940
        %v975 = vmul.f32 %v898, %v936
        %v976 = vmul.f32 %v899, %v940
        %v977 = vmul.f32 %v900, %v936
        %v978 = vmul.f32 %v901, %v940
        %v979 = vmul.f32 %v902, %v936
        %v980 = vmul.f32 %v903, %v940
        %v981 = vmul.f32 %v904, %v936
        %v982 = vmul.f32 %v905, %v940
        %v983 = vmul.f32 %v906, %v936
        %v984 = vmul.f32 %v907, %v940
        %v985 = vmul.f32 %v908, %v936
        %v986 = vmul.f32 %v909, %v940
        %v987 = vmul.f32 %v910, %v936
        %v988 = vmul.f32 %v911, %v940
        %v989 = vmul.f32 %v912, %v936
        %v990 = vmul.f32 %v913, %v940
        %v991 = vmul.f32 %v914, %v936
        %v992 = vmul.f32 %v915, %v940
        %v993 = vmul.f32 %v916, %v936
        %v994 = vmul.f32 %v917, %v940
        %v995 = vmul.f32 %v918, %v936
        %v996 = vmul.f32 %v919, %v940
        %v997 = vmul.f32 %v920, %v936
        %v998 = vmul.f32 %v921, %v940
        %v999 = vmul.f32 %v922, %v936
        %v1000 = vmul.f32 %v923, %v940
        %v1001 = vmul.f32 %v924, %v936
        %v1002 = vmul.f32 %v925, %v940
        %v1003 = vmul.f32 %v926, %v936
        %v1004 = vmul.f32 %v927, %v940
        %v1005 = vmul.f32 %v928, %v936
        %v1006 = vmul.f32 %v929, %v940
        %v1007 = vld [vmem:[%s300] sm:$0x3]
        %v1009 = vlaneseq
        %v1010 = vshrl.u32 %v1009, 7
        %v1011 = vsub.s32 0, %v1010
        %v1012 = vrot.slane %v1007, %v1011
        %v1013 = vlaneseq
        %v1014 = vshrl.u32 %v1013, 7
        %v1015 = vsub.s32 1, %v1014
        %v1016 = vrot.slane %v1007, %v1015
        %v1019 = vadd.f32 %v943, %v1012
        %v1020 = vadd.f32 %v944, %v1016
        %v1021 = vadd.f32 %v945, %v1012
        %v1022 = vadd.f32 %v946, %v1016
        %v1023 = vadd.f32 %v947, %v1012
        %v1024 = vadd.f32 %v948, %v1016
        %v1025 = vadd.f32 %v949, %v1012
        %v1026 = vadd.f32 %v950, %v1016
        %v1027 = vadd.f32 %v951, %v1012
        %v1028 = vadd.f32 %v952, %v1016
        %v1029 = vadd.f32 %v953, %v1012
        %v1030 = vadd.f32 %v954, %v1016
        %v1031 = vadd.f32 %v955, %v1012
        %v1032 = vadd.f32 %v956, %v1016
        %v1033 = vadd.f32 %v957, %v1012
        %v1034 = vadd.f32 %v958, %v1016
        %v1035 = vadd.f32 %v959, %v1012
        %v1036 = vadd.f32 %v960, %v1016
        %v1037 = vadd.f32 %v961, %v1012
        %v1038 = vadd.f32 %v962, %v1016
        %v1039 = vadd.f32 %v963, %v1012
        %v1040 = vadd.f32 %v964, %v1016
        %v1041 = vadd.f32 %v965, %v1012
        %v1042 = vadd.f32 %v966, %v1016
        %v1043 = vadd.f32 %v967, %v1012
        %v1044 = vadd.f32 %v968, %v1016
        %v1045 = vadd.f32 %v969, %v1012
        %v1046 = vadd.f32 %v970, %v1016
        %v1047 = vadd.f32 %v971, %v1012
        %v1048 = vadd.f32 %v972, %v1016
        %v1049 = vadd.f32 %v973, %v1012
        %v1050 = vadd.f32 %v974, %v1016
        %v1051 = vadd.f32 %v975, %v1012
        %v1052 = vadd.f32 %v976, %v1016
        %v1053 = vadd.f32 %v977, %v1012
        %v1054 = vadd.f32 %v978, %v1016
        %v1055 = vadd.f32 %v979, %v1012
        %v1056 = vadd.f32 %v980, %v1016
        %v1057 = vadd.f32 %v981, %v1012
        %v1058 = vadd.f32 %v982, %v1016
        %v1059 = vadd.f32 %v983, %v1012
        %v1060 = vadd.f32 %v984, %v1016
        %v1061 = vadd.f32 %v985, %v1012
        %v1062 = vadd.f32 %v986, %v1016
        %v1063 = vadd.f32 %v987, %v1012
        %v1064 = vadd.f32 %v988, %v1016
        %v1065 = vadd.f32 %v989, %v1012
        %v1066 = vadd.f32 %v990, %v1016
        %v1067 = vadd.f32 %v991, %v1012
        %v1068 = vadd.f32 %v992, %v1016
        %v1069 = vadd.f32 %v993, %v1012
        %v1070 = vadd.f32 %v994, %v1016
        %v1071 = vadd.f32 %v995, %v1012
        %v1072 = vadd.f32 %v996, %v1016
        %v1073 = vadd.f32 %v997, %v1012
        %v1074 = vadd.f32 %v998, %v1016
        %v1075 = vadd.f32 %v999, %v1012
        %v1076 = vadd.f32 %v1000, %v1016
        %v1077 = vadd.f32 %v1001, %v1012
        %v1078 = vadd.f32 %v1002, %v1016
        %v1079 = vadd.f32 %v1003, %v1012
        %v1080 = vadd.f32 %v1004, %v1016
        %v1081 = vadd.f32 %v1005, %v1012
        %v1082 = vadd.f32 %v1006, %v1016
        %v1083 = vpack.c.bf16 %v1021, %v1019
        %v1084 = vpack.c.bf16 %v1022, %v1020
        %v1085 = vpack.c.bf16 %v1025, %v1023
        %v1086 = vpack.c.bf16 %v1026, %v1024
        %v1087 = vpack.c.bf16 %v1029, %v1027
        %v1088 = vpack.c.bf16 %v1030, %v1028
        %v1089 = vpack.c.bf16 %v1033, %v1031
        %v1090 = vpack.c.bf16 %v1034, %v1032
        %v1091 = vpack.c.bf16 %v1037, %v1035
        %v1092 = vpack.c.bf16 %v1038, %v1036
        %v1093 = vpack.c.bf16 %v1041, %v1039
        %v1094 = vpack.c.bf16 %v1042, %v1040
        %v1095 = vpack.c.bf16 %v1045, %v1043
        %v1096 = vpack.c.bf16 %v1046, %v1044
        %v1097 = vpack.c.bf16 %v1049, %v1047
        %v1098 = vpack.c.bf16 %v1050, %v1048
        %v1099 = vpack.c.bf16 %v1053, %v1051
        %v1100 = vpack.c.bf16 %v1054, %v1052
        %v1101 = vpack.c.bf16 %v1057, %v1055
        %v1102 = vpack.c.bf16 %v1058, %v1056
        %v1103 = vpack.c.bf16 %v1061, %v1059
        %v1104 = vpack.c.bf16 %v1062, %v1060
        %v1105 = vpack.c.bf16 %v1065, %v1063
        %v1106 = vpack.c.bf16 %v1066, %v1064
        %v1107 = vpack.c.bf16 %v1069, %v1067
        %v1108 = vpack.c.bf16 %v1070, %v1068
        %v1109 = vpack.c.bf16 %v1073, %v1071
        %v1110 = vpack.c.bf16 %v1074, %v1072
        %v1111 = vpack.c.bf16 %v1077, %v1075
        %v1112 = vpack.c.bf16 %v1078, %v1076
        %v1113 = vpack.c.bf16 %v1081, %v1079
        %v1114 = vpack.c.bf16 %v1082, %v1080
        %v1115 = vld [vmem:[#allocation8] sm:$0xf]
        %v1116 = vld [vmem:[#allocation8 + $0x4] sm:$0xf]
        %v1117 = vld [vmem:[#allocation8 + $0x8] sm:$0xf]
        %v1118 = vld [vmem:[#allocation8 + $0xc] sm:$0xf]
        %v1119 = vld [vmem:[#allocation8 + $0x10] sm:$0xf]
        %v1120 = vld [vmem:[#allocation8 + $0x14] sm:$0xf]
        %v1121 = vld [vmem:[#allocation8 + $0x18] sm:$0xf]
        %v1122 = vld [vmem:[#allocation8 + $0x1c] sm:$0xf]
        %v1123 = vld [vmem:[#allocation8 + $0x20] sm:$0xf]
        %v1124 = vld [vmem:[#allocation8 + $0x24] sm:$0xf]
        %v1125 = vld [vmem:[#allocation8 + $0x28] sm:$0xf]
        %v1126 = vld [vmem:[#allocation8 + $0x2c] sm:$0xf]
        %v1127 = vld [vmem:[#allocation8 + $0x30] sm:$0xf]
        %v1128 = vld [vmem:[#allocation8 + $0x34] sm:$0xf]
        %v1129 = vld [vmem:[#allocation8 + $0x38] sm:$0xf]
        %v1130 = vld [vmem:[#allocation8 + $0x3c] sm:$0xf]
        %v1131 = vld [vmem:[#allocation8 + $0x40] sm:$0xf]
        %v1132 = vld [vmem:[#allocation8 + $0x44] sm:$0xf]
        %v1133 = vld [vmem:[#allocation8 + $0x48] sm:$0xf]
        %v1134 = vld [vmem:[#allocation8 + $0x4c] sm:$0xf]
        %v1135 = vld [vmem:[#allocation8 + $0x50] sm:$0xf]
        %v1136 = vld [vmem:[#allocation8 + $0x54] sm:$0xf]
        %v1137 = vld [vmem:[#allocation8 + $0x58] sm:$0xf]
        %v1138 = vld [vmem:[#allocation8 + $0x5c] sm:$0xf]
        %v1139 = vld [vmem:[#allocation8 + $0x60] sm:$0xf]
        %v1140 = vld [vmem:[#allocation8 + $0x64] sm:$0xf]
        %v1141 = vld [vmem:[#allocation8 + $0x68] sm:$0xf]
        %v1142 = vld [vmem:[#allocation8 + $0x6c] sm:$0xf]
        %v1143 = vld [vmem:[#allocation8 + $0x70] sm:$0xf]
        %v1144 = vld [vmem:[#allocation8 + $0x74] sm:$0xf]
        %v1145 = vld [vmem:[#allocation8 + $0x78] sm:$0xf]
        %v1146 = vld [vmem:[#allocation8 + $0x7c] sm:$0xf]
        %v1147 = vld [vmem:[%s4] sm:$0x1]
        %v1149 = vlaneseq
        %v1150 = vshrl.u32 %v1149, 7
        %v1151 = vsub.s32 0, %v1150
        %v1152 = vrot.slane %v1147, %v1151
        %v1186 = vunpack.c.l.b16 %v1115
        %v1187 = vunpack.c.l.b16 %v1116
        %v1188 = vunpack.c.l.b16 %v1117
        %v1189 = vunpack.c.l.b16 %v1118
        %v1190 = vunpack.c.l.b16 %v1119
        %v1191 = vunpack.c.l.b16 %v1120
        %v1192 = vunpack.c.l.b16 %v1121
        %v1193 = vunpack.c.l.b16 %v1122
        %v1194 = vunpack.c.l.b16 %v1123
        %v1195 = vunpack.c.l.b16 %v1124
        %v1196 = vunpack.c.l.b16 %v1125
        %v1197 = vunpack.c.l.b16 %v1126
        %v1198 = vunpack.c.l.b16 %v1127
        %v1199 = vunpack.c.l.b16 %v1128
        %v1200 = vunpack.c.l.b16 %v1129
        %v1201 = vunpack.c.l.b16 %v1130
        %v1202 = vunpack.c.l.b16 %v1131
        %v1203 = vunpack.c.l.b16 %v1132
        %v1204 = vunpack.c.l.b16 %v1133
        %v1205 = vunpack.c.l.b16 %v1134
        %v1206 = vunpack.c.l.b16 %v1135
        %v1207 = vunpack.c.l.b16 %v1136
        %v1208 = vunpack.c.l.b16 %v1137
        %v1209 = vunpack.c.l.b16 %v1138
        %v1210 = vunpack.c.l.b16 %v1139
        %v1211 = vunpack.c.l.b16 %v1140
        %v1212 = vunpack.c.l.b16 %v1141
        %v1213 = vunpack.c.l.b16 %v1142
        %v1214 = vunpack.c.l.b16 %v1143
        %v1215 = vunpack.c.l.b16 %v1144
        %v1216 = vunpack.c.l.b16 %v1145
        %v1217 = vunpack.c.l.b16 %v1146
        %v1218 = vpack.c.b16 %v1187, %v1186
        %v1219 = vpack.c.b16 %v1189, %v1188
        %v1220 = vpack.c.b16 %v1191, %v1190
        %v1221 = vpack.c.b16 %v1193, %v1192
        %v1222 = vpack.c.b16 %v1195, %v1194
        %v1223 = vpack.c.b16 %v1197, %v1196
        %v1224 = vpack.c.b16 %v1199, %v1198
        %v1225 = vpack.c.b16 %v1201, %v1200
        %v1226 = vpack.c.b16 %v1203, %v1202
        %v1227 = vpack.c.b16 %v1205, %v1204
        %v1228 = vpack.c.b16 %v1207, %v1206
        %v1229 = vpack.c.b16 %v1209, %v1208
        %v1230 = vpack.c.b16 %v1211, %v1210
        %v1231 = vpack.c.b16 %v1213, %v1212
        %v1232 = vpack.c.b16 %v1215, %v1214
        %v1233 = vpack.c.b16 %v1217, %v1216
        %1250 = vmatprep.subr.bf16.mxu0 0
        %1251 = vmatpush1.bf16.msra.mxu0 %v1225
        %1252 = vmatprep.subr.bf16.mxu0 0
        %1253 = vmatpush1.bf16.msra.mxu0 %v1224
        %1254 = vmatprep.subr.bf16.mxu0 0
        %1255 = vmatpush1.bf16.msra.mxu0 %v1223
        %1256 = vmatprep.subr.bf16.mxu0 0
        %1257 = vmatpush1.bf16.msra.mxu0 %v1222
        %1258 = vmatprep.subr.bf16.mxu0 0
        %1259 = vmatpush1.bf16.msra.mxu0 %v1221
        %1260 = vmatprep.subr.bf16.mxu0 0
        %1261 = vmatpush1.bf16.msra.mxu0 %v1220
        %1262 = vmatprep.subr.bf16.mxu0 0
        %1263 = vmatpush1.bf16.msra.mxu0 %v1219
        %1264 = vmatprep.subr.bf16.mxu0 0
        %1265 = vmatpush1.bf16.msra.mxu0 %v1218
        %1266 = vmatprep.subr.bf16.mxu0 0
        %1267 = vmatpush2.bf16.msra.mxu0 %v1233
        %1268 = vmatprep.subr.bf16.mxu0 0
        %1269 = vmatpush2.bf16.msra.mxu0 %v1232
        %1270 = vmatprep.subr.bf16.mxu0 0
        %1271 = vmatpush2.bf16.msra.mxu0 %v1231
        %1272 = vmatprep.subr.bf16.mxu0 0
        %1273 = vmatpush2.bf16.msra.mxu0 %v1230
        %1274 = vmatprep.subr.bf16.mxu0 0
        %1275 = vmatpush2.bf16.msra.mxu0 %v1229
        %1276 = vmatprep.subr.bf16.mxu0 0
        %1277 = vmatpush2.bf16.msra.mxu0 %v1228
        %1278 = vmatprep.subr.bf16.mxu0 0
        %1279 = vmatpush2.bf16.msra.mxu0 %v1227
        %1280 = vmatprep.subr.bf16.mxu0 0
        %1281 = vmatpush2.bf16.msra.mxu0 %v1226
        %1282 = vmatprep.mubr.bf16.mxu0 %v1084
        %1283 = vmatmul.mubr.bf16.gmra.mxu0 %v1083
        %v1284 = vpop.f32.mrf.mxu0
        %v1285 = vadd.f32 %v1152, %v1284
        %v1286 = vpop.f32.mrf.mxu0
        %v1287 = vpop.f32.mrf.mxu0
        %v1288 = vadd.f32 %v1152, %v1287
        %v1289 = vpop.f32.mrf.mxu0
        %1290 = vmatprep.mubr.bf16.mxu0 %v1086
        %1291 = vmatmul.mubr.bf16.gmra.mxu0 %v1085
        %v1292 = vpop.f32.mrf.mxu0
        %v1293 = vadd.f32 %v1152, %v1292
        %v1294 = vpop.f32.mrf.mxu0
        %v1295 = vpop.f32.mrf.mxu0
        %v1296 = vadd.f32 %v1152, %v1295
        %v1297 = vpop.f32.mrf.mxu0
        %1298 = vmatprep.mubr.bf16.mxu0 %v1088
        %1299 = vmatmul.mubr.bf16.gmra.mxu0 %v1087
        %v1300 = vpop.f32.mrf.mxu0
        %v1301 = vadd.f32 %v1152, %v1300
        %v1302 = vpop.f32.mrf.mxu0
        %v1303 = vpop.f32.mrf.mxu0
        %v1304 = vadd.f32 %v1152, %v1303
        %v1305 = vpop.f32.mrf.mxu0
        %1306 = vmatprep.mubr.bf16.mxu0 %v1090
        %1307 = vmatmul.mubr.bf16.gmra.mxu0 %v1089
        %v1308 = vpop.f32.mrf.mxu0
        %v1309 = vadd.f32 %v1152, %v1308
        %v1310 = vpop.f32.mrf.mxu0
        %v1311 = vpop.f32.mrf.mxu0
        %v1312 = vadd.f32 %v1152, %v1311
        %v1313 = vpop.f32.mrf.mxu0
        %1314 = vmatprep.mubr.bf16.mxu0 %v1092
        %1315 = vmatmul.mubr.bf16.gmra.mxu0 %v1091
        %v1316 = vpop.f32.mrf.mxu0
        %v1317 = vadd.f32 %v1152, %v1316
        %v1318 = vpop.f32.mrf.mxu0
        %v1319 = vpop.f32.mrf.mxu0
        %v1320 = vadd.f32 %v1152, %v1319
        %v1321 = vpop.f32.mrf.mxu0
        %1322 = vmatprep.mubr.bf16.mxu0 %v1094
        %1323 = vmatmul.mubr.bf16.gmra.mxu0 %v1093
        %v1324 = vpop.f32.mrf.mxu0
        %v1325 = vadd.f32 %v1152, %v1324
        %v1326 = vpop.f32.mrf.mxu0
        %v1327 = vpop.f32.mrf.mxu0
        %v1328 = vadd.f32 %v1152, %v1327
        %v1329 = vpop.f32.mrf.mxu0
        %1330 = vmatprep.mubr.bf16.mxu0 %v1096
        %1331 = vmatmul.mubr.bf16.gmra.mxu0 %v1095
        %v1332 = vpop.f32.mrf.mxu0
        %v1333 = vadd.f32 %v1152, %v1332
        %v1334 = vpop.f32.mrf.mxu0
        %v1335 = vpop.f32.mrf.mxu0
        %v1336 = vadd.f32 %v1152, %v1335
        %v1337 = vpop.f32.mrf.mxu0
        %1338 = vmatprep.mubr.bf16.mxu0 %v1098
        %1339 = vmatmul.mubr.bf16.gmra.mxu0 %v1097
        %v1340 = vpop.f32.mrf.mxu0
        %v1341 = vadd.f32 %v1152, %v1340
        %v1342 = vpop.f32.mrf.mxu0
        %v1343 = vpop.f32.mrf.mxu0
        %v1344 = vadd.f32 %v1152, %v1343
        %v1345 = vpop.f32.mrf.mxu0
        %1346 = vmatprep.mubr.bf16.mxu0 %v1100
        %1347 = vmatmul.mubr.bf16.gmra.mxu0 %v1099
        %v1348 = vpop.f32.mrf.mxu0
        %v1349 = vadd.f32 %v1152, %v1348
        %v1350 = vpop.f32.mrf.mxu0
        %v1351 = vpop.f32.mrf.mxu0
        %v1352 = vadd.f32 %v1152, %v1351
        %v1353 = vpop.f32.mrf.mxu0
        %1354 = vmatprep.mubr.bf16.mxu0 %v1102
        %1355 = vmatmul.mubr.bf16.gmra.mxu0 %v1101
        %v1356 = vpop.f32.mrf.mxu0
        %v1357 = vadd.f32 %v1152, %v1356
        %v1358 = vpop.f32.mrf.mxu0
        %v1359 = vpop.f32.mrf.mxu0
        %v1360 = vadd.f32 %v1152, %v1359
        %v1361 = vpop.f32.mrf.mxu0
        %1362 = vmatprep.mubr.bf16.mxu0 %v1104
        %1363 = vmatmul.mubr.bf16.gmra.mxu0 %v1103
        %v1364 = vpop.f32.mrf.mxu0
        %v1365 = vadd.f32 %v1152, %v1364
        %v1366 = vpop.f32.mrf.mxu0
        %v1367 = vpop.f32.mrf.mxu0
        %v1368 = vadd.f32 %v1152, %v1367
        %v1369 = vpop.f32.mrf.mxu0
        %1370 = vmatprep.mubr.bf16.mxu0 %v1106
        %1371 = vmatmul.mubr.bf16.gmra.mxu0 %v1105
        %v1372 = vpop.f32.mrf.mxu0
        %v1373 = vadd.f32 %v1152, %v1372
        %v1374 = vpop.f32.mrf.mxu0
        %v1375 = vpop.f32.mrf.mxu0
        %v1376 = vadd.f32 %v1152, %v1375
        %v1377 = vpop.f32.mrf.mxu0
        %1378 = vmatprep.mubr.bf16.mxu0 %v1108
        %1379 = vmatmul.mubr.bf16.gmra.mxu0 %v1107
        %v1380 = vpop.f32.mrf.mxu0
        %v1381 = vadd.f32 %v1152, %v1380
        %v1382 = vpop.f32.mrf.mxu0
        %v1383 = vpop.f32.mrf.mxu0
        %v1384 = vadd.f32 %v1152, %v1383
        %v1385 = vpop.f32.mrf.mxu0
        %1386 = vmatprep.mubr.bf16.mxu0 %v1110
        %1387 = vmatmul.mubr.bf16.gmra.mxu0 %v1109
        %v1388 = vpop.f32.mrf.mxu0
        %v1389 = vadd.f32 %v1152, %v1388
        %v1390 = vpop.f32.mrf.mxu0
        %v1391 = vpop.f32.mrf.mxu0
        %v1392 = vadd.f32 %v1152, %v1391
        %v1393 = vpop.f32.mrf.mxu0
        %1394 = vmatprep.mubr.bf16.mxu0 %v1112
        %1395 = vmatmul.mubr.bf16.gmra.mxu0 %v1111
        %v1396 = vpop.f32.mrf.mxu0
        %v1397 = vadd.f32 %v1152, %v1396
        %v1398 = vpop.f32.mrf.mxu0
        %v1399 = vpop.f32.mrf.mxu0
        %v1400 = vadd.f32 %v1152, %v1399
        %v1401 = vpop.f32.mrf.mxu0
        %1402 = vmatprep.mubr.bf16.mxu0 %v1114
        %1403 = vmatmul.mubr.bf16.gmra.mxu0 %v1113
        %v1404 = vpop.f32.mrf.mxu0
        %v1405 = vadd.f32 %v1152, %v1404
        %v1406 = vpop.f32.mrf.mxu0
        %v1407 = vpop.f32.mrf.mxu0
        %v1408 = vadd.f32 %v1152, %v1407
        %v1409 = vpop.f32.mrf.mxu0
        %1410 = vdwg.mxu0
        %1411 = vst [vmem:[%s349] sm:$0xff] %v1285
        %1412 = vst [vmem:[%s349 + $0x8] sm:$0xff] %v1288
        %1413 = vst [vmem:[%s349 + $0x10] sm:$0xff] %v1293
        %1414 = vst [vmem:[%s349 + $0x18] sm:$0xff] %v1296
        %1415 = vst [vmem:[%s349 + $0x20] sm:$0xff] %v1301
        %1416 = vst [vmem:[%s349 + $0x28] sm:$0xff] %v1304
        %1417 = vst [vmem:[%s349 + $0x30] sm:$0xff] %v1309
        %1418 = vst [vmem:[%s349 + $0x38] sm:$0xff] %v1312
        %1419 = vst [vmem:[%s349 + $0x40] sm:$0xff] %v1317
        %1420 = vst [vmem:[%s349 + $0x48] sm:$0xff] %v1320
        %1421 = vst [vmem:[%s349 + $0x50] sm:$0xff] %v1325
        %1422 = vst [vmem:[%s349 + $0x58] sm:$0xff] %v1328
        %1423 = vst [vmem:[%s349 + $0x60] sm:$0xff] %v1333
        %1424 = vst [vmem:[%s349 + $0x68] sm:$0xff] %v1336
        %1425 = vst [vmem:[%s349 + $0x70] sm:$0xff] %v1341
        %1426 = vst [vmem:[%s349 + $0x78] sm:$0xff] %v1344
        %1427 = vst [vmem:[%s349 + $0x80] sm:$0xff] %v1349
        %1428 = vst [vmem:[%s349 + $0x88] sm:$0xff] %v1352
        %1429 = vst [vmem:[%s349 + $0x90] sm:$0xff] %v1357
        %1430 = vst [vmem:[%s349 + $0x98] sm:$0xff] %v1360
        %1431 = vst [vmem:[%s349 + $0xa0] sm:$0xff] %v1365
        %1432 = vst [vmem:[%s349 + $0xa8] sm:$0xff] %v1368
        %1433 = vst [vmem:[%s349 + $0xb0] sm:$0xff] %v1373
        %1434 = vst [vmem:[%s349 + $0xb8] sm:$0xff] %v1376
        %1435 = vst [vmem:[%s349 + $0xc0] sm:$0xff] %v1381
        %1436 = vst [vmem:[%s349 + $0xc8] sm:$0xff] %v1384
        %1437 = vst [vmem:[%s349 + $0xd0] sm:$0xff] %v1389
        %1438 = vst [vmem:[%s349 + $0xd8] sm:$0xff] %v1392
        %1439 = vst [vmem:[%s349 + $0xe0] sm:$0xff] %v1397
        %1440 = vst [vmem:[%s349 + $0xe8] sm:$0xff] %v1400
        %1441 = vst [vmem:[%s349 + $0xf0] sm:$0xff] %v1405
        %1442 = vst [vmem:[%s349 + $0xf8] sm:$0xff] %v1408
        %s1443 = sand.u32 %s170, 1
        %s1444 = scalar_lea.sflag [#allocation4], %s1443
        %s1445 = sand.u32 %s170, 1
        %s1446 = smul.addr %s1445, 256
        %s1447 = scalar_lea.vmem [#allocation10], %s1446
        // Predicated region
        $region57: #{tpu_custom_call.1} parent=39 // pred_check
          %p1448 = pneg %p180
        $region58: #{tpu_custom_call.1} parent=39 // pred_check_branch
          %1450 = sbr.rel (%p1448) target = $region60
        $region59: #{tpu_custom_call.1} parent=39 // pred_region
          %s1451 = smul.u32 32, %s31
          %s1453 = ssub.s32 4096, 4096
          %1454 = vsyncadd %s1444, %s1453
          %s1455 = smul.addr %s30, 32
          %s1456 = sadd.s32 %s1451, %s1455
          %s1457 = smul.addr %s1456, 128
          %s1458 = scalar_lea.hbm %s5, %s1457
          %s1459 = sshll.u32 %s1447, 4
          %s1460 = int_to_ptr.vmem [resolvable:$true] %s1459
          %1465 = dma.vmem_to_hbm [thread:$0]  %s1460, 4096, %s1458, %s1444, 128, 128, 8
        $region60: #{tpu_custom_call.1} parent=39 // pred_fallthru
          _
      $region40: #{tpu_custom_call.1} parent=5 // pred_fallthru
        _
      %p1466 = scmp.le.s32.totalorder 2, %s21
      // Predicated region
      $region61: #{tpu_custom_call.1} parent=5 // pred_check
        %p1467 = pneg %p1466
      $region62: #{tpu_custom_call.1} parent=5 // pred_check_branch
        %1469 = sbr.rel (%p1467) target = $region64
      $region63: #{tpu_custom_call.1} parent=5 // pred_region
        %s1470 = ssub.s32 %s21, 2
        // Predicated region
        $region65: #{tpu_custom_call.1} parent=63 // pred_check
          %p1471 = pneg %p186
        $region66: #{tpu_custom_call.1} parent=63 // pred_check_branch
          %1473 = sbr.rel (%p1471) target = $region68
        $region67: #{tpu_custom_call.1} parent=63 // pred_region
          %s1474 = sand.u32 %s171, 1
          %s1475 = scalar_lea.sflag [#allocation4], %s1474
          %s1476 = sand.u32 %s171, 1
          %s1477 = smul.addr %s1476, 256
          %s1478 = scalar_lea.vmem [#allocation10], %s1477
          %1479 = dma.done %s1475, 4096
        $region68: #{tpu_custom_call.1} parent=63 // pred_fallthru
          _
      $region64: #{tpu_custom_call.1} parent=5 // pred_fallthru
        _
    $region6: #{tpu_custom_call.1} parent=1 // loop_footer
      %s25 = sadd.s32 1, %s21
    $region7: #{tpu_custom_call.1} parent=1 // loop_footer_branch
      %20 = sbr.rel target = $region3
    $region8: #{tpu_custom_call.1} parent=1 // loop_exit
      _
    %1480 = vsyncpa [#allocation3], 1
    %s1481 = scalar_lea.sflag [#allocation3], 1
    %1482 = vsyncpa %s1481, 1
    %1483 = vsyncpa [#allocation6], 1
    %s1484 = scalar_lea.sflag [#allocation6], 1
    %1485 = vsyncpa %s1484, 1
    %1486 = vsyncpa [#allocation9], 1
    %1487 = vsyncpa [#allocation4], 1
    %s1488 = scalar_lea.sflag [#allocation4], 1
    %1489 = vsyncpa %s1488, 1

</llo_original>
